<compile_context>
chip_gen: v5e
topology: v5e:2x2
jax: 0.10.0
libtpu: 0.0.40
codegen_flags: <defaults>
</compile_context>

<pallas_src>
import math

import jax
import jax.numpy as jnp
from jax.experimental import pallas as pl
from jax.experimental.pallas import tpu as pltpu

# ----------------------------- config ---------------------------------------
N_VOCAB = 1000
N_EMBD = 64          # D
N_TOKENS = 8         # S (max sequence length)
N_HEAD = 4
N_LAYERS = 2
BATCH = 4
B_BLK = 2            # batch block per grid step (keeps #blocks even for megacore)
EPS = 1e-5
NEG_INF = -1e30


# ----------------------------- kernel ---------------------------------------
def _layer_norm(v, g, b):
    # Single-pass LN: one pair of cross-lane reductions instead of two means.
    mu = jnp.mean(v, axis=-1, keepdims=True)
    m2 = jnp.mean(v * v, axis=-1, keepdims=True)
    var = m2 - mu * mu
    return (v - mu) * jax.lax.rsqrt(var + EPS) * g + b


def _attention_one_seq(qkv_b, H, dh, causal, scale):
    """Causal multi-head attention for one sequence: qkv_b is (S, 3*D) f32."""
    S = qkv_b.shape[0]
    D = H * dh
    # TODO(synk): pltpu.einshape would do these head split/merge transposes
    # without materialized relayout copies; kept as jnp ops for robustness.
    q = (qkv_b[:, :D] * scale).reshape(S, H, dh)        # scale folded into q
    k = qkv_b[:, D:2 * D].reshape(S, H, dh)
    v = qkv_b[:, 2 * D:].reshape(S, H, dh)
    qh = jnp.swapaxes(q, 0, 1).astype(jnp.bfloat16)     # (H, S, dh)
    kh = jnp.swapaxes(k, 0, 1).astype(jnp.bfloat16)
    vh = jnp.swapaxes(v, 0, 1).astype(jnp.bfloat16)

    s = jnp.einsum("hqd,hkd->hqk", qh, kh,
                   preferred_element_type=jnp.float32)  # (H, S, S) f32
    s = jnp.where(causal, NEG_INF, s)                   # scores stay f32
    s = s - jnp.max(s, axis=-1, keepdims=True)
    p = jnp.exp(s)
    # Approximate EUP reciprocal in the softmax denominator (~2^-12 rel err).
    p = p * pl.reciprocal(jnp.sum(p, axis=-1, keepdims=True), approx=True)
    ctx = jnp.einsum("hqk,hkd->hqd", p.astype(jnp.bfloat16), vh,
                     preferred_element_type=jnp.float32)  # (H, S, dh)
    return jnp.swapaxes(ctx, 0, 1).reshape(S, D)


def clip_fused_kernel(x0_ref,
                      g1_ref, b1_ref, wqkv_ref, bqkv_ref, wo_ref, bo_ref,
                      g2_ref, b2_ref, w1_ref, bm1_ref, w2_ref, bm2_ref,
                      lng_ref, lnb_ref,
                      o_ref):
    layer = pl.program_id(1)
    n_layers = pl.num_programs(1)
    Bb, S, D = o_ref.shape
    M = Bb * S
    H = N_HEAD
    dh = D // H
    scale = 1.0 / math.sqrt(dh)

    # o_ref is the layer-resident residual stream for this batch block
    # (its index_map ignores the layer axis).  Initialize it at layer 0.
    @pl.when(layer == 0)
    def _():
        o_ref[...] = x0_ref[...]

    x = o_ref[...].reshape(M, D)                        # (M, D) f32 residual

    # ---- attention block ----------------------------------------------------
    xn = _layer_norm(x, g1_ref[0], b1_ref[0])
    qkv = jnp.dot(xn.astype(jnp.bfloat16), wqkv_ref[0],
                  preferred_element_type=jnp.float32) + bqkv_ref[0]   # (M, 3D)

    row = jax.lax.broadcasted_iota(jnp.int32, (S, S), 0)
    col = jax.lax.broadcasted_iota(jnp.int32, (S, S), 1)
    causal = (col > row)[None]                          # (1, S, S)

    # Attention is per (batch, head); heads are batched in one einsum, the
    # (static, small) batch-block dimension is unrolled.
    ctx_rows = [_attention_one_seq(qkv[b * S:(b + 1) * S], H, dh, causal, scale)
                for b in range(Bb)]
    attn = ctx_rows[0] if Bb == 1 else jnp.concatenate(ctx_rows, axis=0)  # (M, D)
    attn = jnp.dot(attn.astype(jnp.bfloat16), wo_ref[0],
                   preferred_element_type=jnp.float32) + bo_ref[0]
    x = x + attn

    # ---- MLP block (quick GELU, bf16 elementwise) ---------------------------
    xn = _layer_norm(x, g2_ref[0], b2_ref[0])
    h1 = jnp.dot(xn.astype(jnp.bfloat16), w1_ref[0],
                 preferred_element_type=jnp.float32) + bm1_ref[0]
    h1 = h1.astype(jnp.bfloat16)
    h1 = h1 * jax.nn.sigmoid(1.702 * h1)                # quick GELU in bf16
    h2 = jnp.dot(h1, w2_ref[0],
                 preferred_element_type=jnp.float32) + bm2_ref[0]
    x = x + h2

    # Residual stream stays resident in o_ref across the "arbitrary" layer
    # axis; only the last layer writes the final LayerNorm result.
    @pl.when(layer < n_layers - 1)
    def _():
        o_ref[...] = x.reshape(Bb, S, D)

    @pl.when(layer == n_layers - 1)
    def _():
        o_ref[...] = _layer_norm(x, lng_ref[...], lnb_ref[...]).reshape(Bb, S, D)


# ----------------------------- wrapper ---------------------------------------
def clip_forward(tokens, packed, *, b_blk=B_BLK):
    tokens = tokens.astype(jnp.int32)
    # TODO(synk): data-dependent embedding-table gather stays in JAX (jnp.take);
    # an in-kernel scalar-prefetch + per-row DMA gather would fuse it too.
    tok_emb = jnp.take(packed["tok_table"], tokens, axis=0)          # (B, S, D)
    x0 = (tok_emb + packed["pos"][None]).astype(jnp.float32)         # fused add in JAX

    B, S = tokens.shape
    D = N_EMBD
    L = N_LAYERS
    H = N_HEAD
    assert B % b_blk == 0, (B, b_blk)
    nb = B // b_blk
    M = b_blk * S

    act_spec = pl.BlockSpec((b_blk, S, D), lambda b, l: (b, 0, 0))
    ln_spec = pl.BlockSpec((1, D), lambda b, l: (0, 0))

    def lspec(shape):  # per-layer stacked tensor of shape (L, *shape)
        zeros = (0,) * len(shape)
        return pl.BlockSpec((1,) + shape, lambda b, l: (l,) + zeros)

    in_specs = [
        act_spec,            # x0 (tok_emb + pos)
        lspec((1, D)),       # g1
        lspec((1, D)),       # b1
        lspec((D, 3 * D)),   # wqkv (bf16)
        lspec((1, 3 * D)),   # bqkv
        lspec((D, D)),       # wo   (bf16)
        lspec((1, D)),       # bo
        lspec((1, D)),       # g2
        lspec((1, D)),       # b2
        lspec((D, 4 * D)),   # w1   (bf16)
        lspec((1, 4 * D)),   # bm1
        lspec((4 * D, D)),   # w2   (bf16)
        lspec((1, D)),       # bm2
        ln_spec,             # ln_g
        ln_spec,             # ln_b
    ]

    # Advisory cost estimate for XLA's scheduler around the fused call.
    per_step_matmul_flops = 2 * M * D * (3 * D + D + 4 * D + 4 * D)
    per_step_attn_flops = 4 * b_blk * S * S * D
    flops = nb * L * (per_step_matmul_flops + per_step_attn_flops)
    transcendentals = nb * L * (b_blk * H * S * S + M * 4 * D)
    wbytes_per_layer = 2 * D * D * (3 + 1 + 4 + 4) + 4 * 14 * D
    bytes_accessed = nb * L * wbytes_per_layer + 2 * B * S * D * 4

    return pl.pallas_call(
        clip_fused_kernel,
        out_shape=jax.ShapeDtypeStruct((B, S, D), jnp.float32),
        grid_spec=pltpu.PrefetchScalarGridSpec(
            num_scalar_prefetch=0,
            grid=(nb, L),
            in_specs=in_specs,
            out_specs=act_spec,
        ),
        compiler_params=pltpu.CompilerParams(
            dimension_semantics=("parallel", "arbitrary"),
            vmem_limit_bytes=48 * 1024 * 1024,
        ),
        cost_estimate=pl.CostEstimate(
            flops=int(flops),
            transcendentals=int(transcendentals),
            bytes_accessed=int(bytes_accessed),
        ),
    )(x0,
      packed["g1"], packed["b1"], packed["wqkv"], packed["bqkv"],
      packed["wo"], packed["bo"], packed["g2"], packed["b2"],
      packed["w1"], packed["bm1"], packed["w2"], packed["bm2"],
      packed["ln_g"], packed["ln_b"])


# ----------------------------- params ---------------------------------------
def make_params(key):
    D, Dh = N_EMBD, 4 * N_EMBD
    keys = iter(jax.random.split(key, 8 + N_LAYERS * 8))

    def w(shape, scale=0.02):
        return (scale * jax.random.normal(next(keys), shape)).astype(jnp.float32)

    params = {
        "tok_table": w((N_VOCAB, D)),
        "pos": w((N_TOKENS, D), scale=0.01),  # nn.Parameter(zeros) in torch; random here
        "ln_g": jnp.ones((D,), jnp.float32),
        "ln_b": jnp.zeros((D,), jnp.float32),
        "layers": [],
    }
    for _ in range(N_LAYERS):
        params["layers"].append({
            "g1": jnp.ones((1, D), jnp.float32), "b1": jnp.zeros((1, D), jnp.float32),
            "wq": w((D, D)), "bq": jnp.zeros((1, D), jnp.float32),
            "wk": w((D, D)), "bk": jnp.zeros((1, D), jnp.float32),
            "wv": w((D, D)), "bv": jnp.zeros((1, D), jnp.float32),
            "wo": w((D, D)), "bo": jnp.zeros((1, D), jnp.float32),
            "g2": jnp.ones((1, D), jnp.float32), "b2": jnp.zeros((1, D), jnp.float32),
            "w1": w((D, Dh)), "bm1": jnp.zeros((1, Dh), jnp.float32),
            "w2": w((Dh, D)), "bm2": jnp.zeros((1, D), jnp.float32),
        })
    return params


def pack_params(params):
    """Stack per-layer params on a leading L axis; cast matmul weights to bf16."""
    layers = params["layers"]

    def stack(name, dtype=jnp.float32):
        return jnp.stack([p[name] for p in layers]).astype(dtype)

    packed = {
        "tok_table": params["tok_table"],
        "pos": params["pos"],
        "ln_g": params["ln_g"].reshape(1, -1),
        "ln_b": params["ln_b"].reshape(1, -1),
        "g1": stack("g1"), "b1": stack("b1"),
        "wqkv": jnp.stack([jnp.concatenate([p["wq"], p["wk"], p["wv"]], axis=1)
                           for p in layers]).astype(jnp.bfloat16),
        "bqkv": jnp.stack([jnp.concatenate([p["bq"], p["bk"], p["bv"]], axis=1)
                           for p in layers]),
        "wo": stack("wo", jnp.bfloat16), "bo": stack("bo"),
        "g2": stack("g2"), "b2": stack("b2"),
        "w1": stack("w1", jnp.bfloat16), "bm1": stack("bm1"),
        "w2": stack("w2", jnp.bfloat16), "bm2": stack("bm2"),
    }
    return packed


# ----------------------------- pure-JAX reference ----------------------------
def ref_forward(tokens, params, matmul_dtype=jnp.float32):
    """Reference forward.  matmul_dtype=bfloat16 mirrors the kernel's
    mixed-precision policy (bf16 matmul operands, f32 accumulation)."""
    def ln(v, g, b):
        mu = jnp.mean(v, -1, keepdims=True)
        var = jnp.mean((v - mu) ** 2, -1, keepdims=True)
        return (v - mu) / jnp.sqrt(var + EPS) * g + b

    def mm(a, w):
        return jnp.dot(a.astype(matmul_dtype), w.astype(matmul_dtype),
                       preferred_element_type=jnp.float32)

    B, S = tokens.shape
    D = N_EMBD
    H = N_HEAD
    dh = D // H
    scale = 1.0 / math.sqrt(dh)

    x = jnp.take(params["tok_table"], tokens, axis=0) + params["pos"][None]
    causal = jnp.triu(jnp.ones((S, S), bool), k=1)
    for p in params["layers"]:
        r = x
        xn = ln(x, p["g1"][0], p["b1"][0])
        q = mm(xn, p["wq"]) + p["bq"][0]
        k = mm(xn, p["wk"]) + p["bk"][0]
        v = mm(xn, p["wv"]) + p["bv"][0]
        q = (q * scale).reshape(B, S, H, dh).transpose(0, 2, 1, 3)
        k = k.reshape(B, S, H, dh).transpose(0, 2, 1, 3)
        v = v.reshape(B, S, H, dh).transpose(0, 2, 1, 3)
        s = jnp.einsum("bhqd,bhkd->bhqk",
                       q.astype(matmul_dtype), k.astype(matmul_dtype),
                       preferred_element_type=jnp.float32)
        s = jnp.where(causal[None, None], NEG_INF, s)
        p_attn = jax.nn.softmax(s, axis=-1)
        o = jnp.einsum("bhqk,bhkd->bhqd",
                       p_attn.astype(matmul_dtype), v.astype(matmul_dtype),
                       preferred_element_type=jnp.float32)
        o = o.transpose(0, 2, 1, 3).reshape(B, S, D)
        x = mm(o, p["wo"]) + p["bo"][0] + r
        r = x
        xn = ln(x, p["g2"][0], p["b2"][0])
        h = mm(xn, p["w1"]) + p["bm1"][0]
        h = h * jax.nn.sigmoid(1.702 * h)
        x = mm(h, p["w2"]) + p["bm2"][0] + r
    return ln(x, params["ln_g"], params["ln_b"])


# ----------------------------- main ------------------------------------------
if __name__ == "__main__":
    key = jax.random.PRNGKey(0)
    pkey, tkey = jax.random.split(key)
    params = make_params(pkey)
    packed = pack_params(params)
    tokens = jax.random.randint(tkey, (BATCH, N_TOKENS), 0, N_VOCAB, dtype=jnp.int32)

    out = jax.jit(clip_forward)(tokens, packed)
    out = jax.block_until_ready(out)

    assert out.shape == (BATCH, N_TOKENS, N_EMBD), out.shape
    assert bool(jnp.all(jnp.isfinite(out)))

    # Tight check vs. a reference with the same mixed-precision policy.
    ref_bf16 = ref_forward(tokens, params, matmul_dtype=jnp.bfloat16)
    err = float(jnp.max(jnp.abs(out - ref_bf16)))
    assert err < 5e-2, f"mismatch vs bf16-matmul reference: {err}"

    # Looser sanity check vs. the full-f32 reference semantics.
    ref_f32 = ref_forward(tokens, params, matmul_dtype=jnp.float32)
    err32 = float(jnp.max(jnp.abs(out - ref_f32)))
    assert err32 < 1.5e-1, f"mismatch vs f32 reference: {err32}"

    print("KERNEL_OK")
</pallas_src>

<mosaic_0001>
module attributes {stable_mosaic.version = 11 : i64} {
  func.func @clip_fused_kernel(%arg0: i32, %arg1: i32, %arg2: memref<2x8x64xf32, #tpu.memory_space<vmem>>, %arg3: memref<1x1x64xf32, #tpu.memory_space<vmem>>, %arg4: memref<1x1x64xf32, #tpu.memory_space<vmem>>, %arg5: memref<1x64x192xbf16, #tpu.memory_space<vmem>>, %arg6: memref<1x1x192xf32, #tpu.memory_space<vmem>>, %arg7: memref<1x64x64xbf16, #tpu.memory_space<vmem>>, %arg8: memref<1x1x64xf32, #tpu.memory_space<vmem>>, %arg9: memref<1x1x64xf32, #tpu.memory_space<vmem>>, %arg10: memref<1x1x64xf32, #tpu.memory_space<vmem>>, %arg11: memref<1x64x256xbf16, #tpu.memory_space<vmem>>, %arg12: memref<1x1x256xf32, #tpu.memory_space<vmem>>, %arg13: memref<1x256x64xbf16, #tpu.memory_space<vmem>>, %arg14: memref<1x1x64xf32, #tpu.memory_space<vmem>>, %arg15: memref<1x64xf32, #tpu.memory_space<vmem>>, %arg16: memref<1x64xf32, #tpu.memory_space<vmem>>, %arg17: memref<2x8x64xf32, #tpu.memory_space<vmem>>) attributes {dimension_semantics = [#tpu.dimension_semantics<parallel>, #tpu.dimension_semantics<arbitrary>], iteration_bounds = array<i64: 2, 2>, scalar_prefetch = 0 : i64, scratch_operands = 0 : i64, tpu.core_type = #tpu.core_type<tc>, window_params = [{transform_indices = @transform_0, window_bounds = array<i64: 2, 8, 64>}, {transform_indices = @transform_1, window_bounds = array<i64: 1, 1, 64>}, {transform_indices = @transform_2, window_bounds = array<i64: 1, 1, 64>}, {transform_indices = @transform_3, window_bounds = array<i64: 1, 64, 192>}, {transform_indices = @transform_4, window_bounds = array<i64: 1, 1, 192>}, {transform_indices = @transform_5, window_bounds = array<i64: 1, 64, 64>}, {transform_indices = @transform_6, window_bounds = array<i64: 1, 1, 64>}, {transform_indices = @transform_7, window_bounds = array<i64: 1, 1, 64>}, {transform_indices = @transform_8, window_bounds = array<i64: 1, 1, 64>}, {transform_indices = @transform_9, window_bounds = array<i64: 1, 64, 256>}, {transform_indices = @transform_10, window_bounds = array<i64: 1, 1, 256>}, {transform_indices = @transform_11, window_bounds = array<i64: 1, 256, 64>}, {transform_indices = @transform_12, window_bounds = array<i64: 1, 1, 64>}, {pipeline_mode = #tpu.pipeline_mode<synchronous>, transform_indices = @transform_13, window_bounds = array<i64: 1, 64>}, {pipeline_mode = #tpu.pipeline_mode<synchronous>, transform_indices = @transform_14, window_bounds = array<i64: 1, 64>}, {transform_indices = @transform_15, window_bounds = array<i64: 2, 8, 64>}]} {
    %c0_i32 = arith.constant 0 : i32
    %0 = arith.cmpi eq, %arg1, %c0_i32 : i32
    %1 = arith.extui %0 : i1 to i32
    %c0_i32_0 = arith.constant 0 : i32
    %2 = arith.cmpi ne, %1, %c0_i32_0 : i32
    scf.if %2 {
      %c0_69 = arith.constant 0 : index
      %c0_70 = arith.constant 0 : index
      %c0_71 = arith.constant 0 : index
      %178 = vector.load %arg2[%c0_69, %c0_70, %c0_71] : memref<2x8x64xf32, #tpu.memory_space<vmem>>, vector<2x8x64xf32>
      %c0_72 = arith.constant 0 : index
      %c0_73 = arith.constant 0 : index
      %c0_74 = arith.constant 0 : index
      %179 = vector.load %arg17[%c0_72, %c0_73, %c0_74] : memref<2x8x64xf32, #tpu.memory_space<vmem>>, vector<2x8x64xf32>
      tpu.vector_store %arg17[%c0_72, %c0_73, %c0_74], %178 {strides = array<i32>} : memref<2x8x64xf32, #tpu.memory_space<vmem>>, vector<2x8x64xf32>,
    } else {
    }
    %c0 = arith.constant 0 : index
    %c0_1 = arith.constant 0 : index
    %c0_2 = arith.constant 0 : index
    %3 = vector.load %arg17[%c0, %c0_1, %c0_2] : memref<2x8x64xf32, #tpu.memory_space<vmem>>, vector<2x8x64xf32>
    %4 = vector.shape_cast %3 : vector<2x8x64xf32> to vector<16x64xf32>
    %c0_3 = arith.constant 0 : index
    %c0_4 = arith.constant 0 : index
    %c0_5 = arith.constant 0 : index
    %5 = vector.load %arg3[%c0_3, %c0_4, %c0_5] : memref<1x1x64xf32, #tpu.memory_space<vmem>>, vector<1x1x64xf32>
    %6 = vector.shape_cast %5 : vector<1x1x64xf32> to vector<1x64xf32>
    %c0_6 = arith.constant 0 : index
    %c0_7 = arith.constant 0 : index
    %c0_8 = arith.constant 0 : index
    %7 = vector.load %arg4[%c0_6, %c0_7, %c0_8] : memref<1x1x64xf32, #tpu.memory_space<vmem>>, vector<1x1x64xf32>
    %8 = vector.shape_cast %7 : vector<1x1x64xf32> to vector<1x64xf32>
    %cst = arith.constant dense<0.000000e+00> : vector<16xf32>
    %9 = vector.multi_reduction <add>, %4, %cst [1] : vector<16x64xf32> to vector<16xf32>
    %10 = vector.shape_cast %9 : vector<16xf32> to vector<16x1xf32>
    %cst_9 = arith.constant 6.400000e+01 : f32
    %11 = vector.broadcast %cst_9 : f32 to vector<16x1xf32>
    %12 = arith.divf %10, %11 : vector<16x1xf32>
    %13 = arith.mulf %4, %4 : vector<16x64xf32>
    %cst_10 = arith.constant dense<0.000000e+00> : vector<16xf32>
    %14 = vector.multi_reduction <add>, %13, %cst_10 [1] : vector<16x64xf32> to vector<16xf32>
    %15 = vector.shape_cast %14 : vector<16xf32> to vector<16x1xf32>
    %cst_11 = arith.constant 6.400000e+01 : f32
    %16 = vector.broadcast %cst_11 : f32 to vector<16x1xf32>
    %17 = arith.divf %15, %16 : vector<16x1xf32>
    %18 = arith.mulf %12, %12 : vector<16x1xf32>
    %19 = arith.subf %17, %18 : vector<16x1xf32>
    %20 = vector.broadcast %12 : vector<16x1xf32> to vector<16x64xf32>
    %21 = arith.subf %4, %20 : vector<16x64xf32>
    %cst_12 = arith.constant 9.99999974E-6 : f32
    %22 = vector.broadcast %cst_12 : f32 to vector<16x1xf32>
    %23 = arith.addf %19, %22 : vector<16x1xf32>
    %24 = math.rsqrt %23 : vector<16x1xf32>
    %25 = vector.broadcast %24 : vector<16x1xf32> to vector<16x64xf32>
    %26 = arith.mulf %21, %25 : vector<16x64xf32>
    %27 = vector.broadcast %6 : vector<1x64xf32> to vector<16x64xf32>
    %28 = arith.mulf %26, %27 : vector<16x64xf32>
    %29 = vector.broadcast %8 : vector<1x64xf32> to vector<16x64xf32>
    %30 = arith.addf %28, %29 : vector<16x64xf32>
    %31 = arith.truncf %30 : vector<16x64xf32> to vector<16x64xbf16>
    %c0_13 = arith.constant 0 : index
    %c0_14 = arith.constant 0 : index
    %c0_15 = arith.constant 0 : index
    %32 = vector.load %arg5[%c0_13, %c0_14, %c0_15] : memref<1x64x192xbf16, #tpu.memory_space<vmem>>, vector<1x64x192xbf16>
    %33 = vector.shape_cast %32 : vector<1x64x192xbf16> to vector<64x192xbf16>
    %cst_16 = arith.constant dense<0.000000e+00> : vector<16x192xf32>
    %34 = tpu.matmul %31, %33, %cst_16 {dimension_numbers = #tpu.dot_dimension_numbers<[1], [0], [0], [1], [0, 0, 1, 1], [], []>} : vector<16x64xbf16>, vector<64x192xbf16>, vector<16x192xf32> -> vector<16x192xf32>
    %c0_17 = arith.constant 0 : index
    %c0_18 = arith.constant 0 : index
    %c0_19 = arith.constant 0 : index
    %35 = vector.load %arg6[%c0_17, %c0_18, %c0_19] : memref<1x1x192xf32, #tpu.memory_space<vmem>>, vector<1x1x192xf32>
    %36 = vector.shape_cast %35 : vector<1x1x192xf32> to vector<1x192xf32>
    %37 = vector.broadcast %36 : vector<1x192xf32> to vector<16x192xf32>
    %38 = arith.addf %34, %37 : vector<16x192xf32>
    %39 = tpu.iota {dimensions = array<i32: 0>} : vector<8x8xi32>
    %40 = tpu.iota {dimensions = array<i32: 1>} : vector<8x8xi32>
    %41 = arith.cmpi sgt, %40, %39 : vector<8x8xi32>
    %42 = vector.shape_cast %41 : vector<8x8xi1> to vector<1x8x8xi1>
    %43 = vector.extract_strided_slice %38 {offsets = [0, 0], sizes = [8, 192], strides = [1, 1]} : vector<16x192xf32> to vector<8x192xf32>
    %44 = vector.extract_strided_slice %43 {offsets = [0, 0], sizes = [8, 64], strides = [1, 1]} : vector<8x192xf32> to vector<8x64xf32>
    %cst_20 = arith.constant 2.500000e-01 : f32
    %45 = vector.broadcast %cst_20 : f32 to vector<8x64xf32>
    %46 = arith.mulf %44, %45 : vector<8x64xf32>
    %47 = vector.shape_cast %46 : vector<8x64xf32> to vector<8x4x16xf32>
    %48 = vector.extract_strided_slice %43 {offsets = [0, 64], sizes = [8, 64], strides = [1, 1]} : vector<8x192xf32> to vector<8x64xf32>
    %49 = vector.shape_cast %48 : vector<8x64xf32> to vector<8x4x16xf32>
    %50 = vector.extract_strided_slice %43 {offsets = [0, 128], sizes = [8, 64], strides = [1, 1]} : vector<8x192xf32> to vector<8x64xf32>
    %51 = vector.shape_cast %50 : vector<8x64xf32> to vector<8x4x16xf32>
    %52 = tpu.transpose %47, [1, 0, 2] : vector<8x4x16xf32> -> vector<4x8x16xf32>
    %53 = arith.truncf %52 : vector<4x8x16xf32> to vector<4x8x16xbf16>
    %54 = tpu.transpose %49, [1, 0, 2] : vector<8x4x16xf32> -> vector<4x8x16xf32>
    %55 = arith.truncf %54 : vector<4x8x16xf32> to vector<4x8x16xbf16>
    %56 = tpu.transpose %51, [1, 0, 2] : vector<8x4x16xf32> -> vector<4x8x16xf32>
    %57 = arith.truncf %56 : vector<4x8x16xf32> to vector<4x8x16xbf16>
    "tpu.trace_start"() <{level = 10 : i32, message = "hqd,hkd->hqk"}> : () -> ()
    %cst_21 = arith.constant dense<0.000000e+00> : vector<4x8x8xf32>
    %58 = tpu.matmul %53, %55, %cst_21 {dimension_numbers = #tpu.dot_dimension_numbers<[2], [2], [1], [1], [0, 0, 0, 1, 1, 1], [0], [0]>} : vector<4x8x16xbf16>, vector<4x8x16xbf16>, vector<4x8x8xf32> -> vector<4x8x8xf32>
    %cst_22 = arith.constant -1.000000e+30 : f32
    "tpu.trace_stop"() : () -> ()
    %59 = vector.shape_cast %42 : vector<1x8x8xi1> to vector<1x8x8xi1>
    %60 = vector.broadcast %59 : vector<1x8x8xi1> to vector<4x8x8xi1>
    %61 = vector.broadcast %cst_22 : f32 to vector<4x8x8xf32>
    %62 = arith.select %60, %61, %58 : vector<4x8x8xi1>, vector<4x8x8xf32>
    %cst_23 = arith.constant dense<0xFF800000> : vector<4x8xf32>
    %63 = vector.multi_reduction <maximumf>, %62, %cst_23 [2] : vector<4x8x8xf32> to vector<4x8xf32>
    %64 = vector.shape_cast %63 : vector<4x8xf32> to vector<4x8x1xf32>
    %65 = vector.broadcast %64 : vector<4x8x1xf32> to vector<4x8x8xf32>
    %66 = arith.subf %62, %65 : vector<4x8x8xf32>
    %67 = math.exp %66 : vector<4x8x8xf32>
    %cst_24 = arith.constant dense<0.000000e+00> : vector<4x8xf32>
    %68 = vector.multi_reduction <add>, %67, %cst_24 [2] : vector<4x8x8xf32> to vector<4x8xf32>
    %69 = vector.shape_cast %68 : vector<4x8xf32> to vector<4x8x1xf32>
    %70 = tpu.reciprocal %69 {approx = true} : vector<4x8x1xf32> -> vector<4x8x1xf32>
    %71 = vector.broadcast %70 : vector<4x8x1xf32> to vector<4x8x8xf32>
    %72 = arith.mulf %67, %71 : vector<4x8x8xf32>
    %73 = arith.truncf %72 : vector<4x8x8xf32> to vector<4x8x8xbf16>
    "tpu.trace_start"() <{level = 10 : i32, message = "hqk,hkd->hqd"}> : () -> ()
    %cst_25 = arith.constant dense<0.000000e+00> : vector<4x8x16xf32>
    %74 = tpu.matmul %73, %57, %cst_25 {dimension_numbers = #tpu.dot_dimension_numbers<[2], [1], [1], [2], [0, 0, 0, 1, 1, 2], [0], [0]>} : vector<4x8x8xbf16>, vector<4x8x16xbf16>, vector<4x8x16xf32> -> vector<4x8x16xf32>
    "tpu.trace_stop"() : () -> ()
    %75 = tpu.transpose %74, [1, 0, 2] : vector<4x8x16xf32> -> vector<8x4x16xf32>
    %76 = vector.shape_cast %75 : vector<8x4x16xf32> to vector<8x64xf32>
    %77 = vector.extract_strided_slice %38 {offsets = [8, 0], sizes = [8, 192], strides = [1, 1]} : vector<16x192xf32> to vector<8x192xf32>
    %78 = vector.extract_strided_slice %77 {offsets = [0, 0], sizes = [8, 64], strides = [1, 1]} : vector<8x192xf32> to vector<8x64xf32>
    %cst_26 = arith.constant 2.500000e-01 : f32
    %79 = vector.broadcast %cst_26 : f32 to vector<8x64xf32>
    %80 = arith.mulf %78, %79 : vector<8x64xf32>
    %81 = vector.shape_cast %80 : vector<8x64xf32> to vector<8x4x16xf32>
    %82 = vector.extract_strided_slice %77 {offsets = [0, 64], sizes = [8, 64], strides = [1, 1]} : vector<8x192xf32> to vector<8x64xf32>
    %83 = vector.shape_cast %82 : vector<8x64xf32> to vector<8x4x16xf32>
    %84 = vector.extract_strided_slice %77 {offsets = [0, 128], sizes = [8, 64], strides = [1, 1]} : vector<8x192xf32> to vector<8x64xf32>
    %85 = vector.shape_cast %84 : vector<8x64xf32> to vector<8x4x16xf32>
    %86 = tpu.transpose %81, [1, 0, 2] : vector<8x4x16xf32> -> vector<4x8x16xf32>
    %87 = arith.truncf %86 : vector<4x8x16xf32> to vector<4x8x16xbf16>
    %88 = tpu.transpose %83, [1, 0, 2] : vector<8x4x16xf32> -> vector<4x8x16xf32>
    %89 = arith.truncf %88 : vector<4x8x16xf32> to vector<4x8x16xbf16>
    %90 = tpu.transpose %85, [1, 0, 2] : vector<8x4x16xf32> -> vector<4x8x16xf32>
    %91 = arith.truncf %90 : vector<4x8x16xf32> to vector<4x8x16xbf16>
    "tpu.trace_start"() <{level = 10 : i32, message = "hqd,hkd->hqk"}> : () -> ()
    %cst_27 = arith.constant dense<0.000000e+00> : vector<4x8x8xf32>
    %92 = tpu.matmul %87, %89, %cst_27 {dimension_numbers = #tpu.dot_dimension_numbers<[2], [2], [1], [1], [0, 0, 0, 1, 1, 1], [0], [0]>} : vector<4x8x16xbf16>, vector<4x8x16xbf16>, vector<4x8x8xf32> -> vector<4x8x8xf32>
    %cst_28 = arith.constant -1.000000e+30 : f32
    "tpu.trace_stop"() : () -> ()
    %93 = vector.shape_cast %42 : vector<1x8x8xi1> to vector<1x8x8xi1>
    %94 = vector.broadcast %93 : vector<1x8x8xi1> to vector<4x8x8xi1>
    %95 = vector.broadcast %cst_28 : f32 to vector<4x8x8xf32>
    %96 = arith.select %94, %95, %92 : vector<4x8x8xi1>, vector<4x8x8xf32>
    %cst_29 = arith.constant dense<0xFF800000> : vector<4x8xf32>
    %97 = vector.multi_reduction <maximumf>, %96, %cst_29 [2] : vector<4x8x8xf32> to vector<4x8xf32>
    %98 = vector.shape_cast %97 : vector<4x8xf32> to vector<4x8x1xf32>
    %99 = vector.broadcast %98 : vector<4x8x1xf32> to vector<4x8x8xf32>
    %100 = arith.subf %96, %99 : vector<4x8x8xf32>
    %101 = math.exp %100 : vector<4x8x8xf32>
    %cst_30 = arith.constant dense<0.000000e+00> : vector<4x8xf32>
    %102 = vector.multi_reduction <add>, %101, %cst_30 [2] : vector<4x8x8xf32> to vector<4x8xf32>
    %103 = vector.shape_cast %102 : vector<4x8xf32> to vector<4x8x1xf32>
    %104 = tpu.reciprocal %103 {approx = true} : vector<4x8x1xf32> -> vector<4x8x1xf32>
    %105 = vector.broadcast %104 : vector<4x8x1xf32> to vector<4x8x8xf32>
    %106 = arith.mulf %101, %105 : vector<4x8x8xf32>
    %107 = arith.truncf %106 : vector<4x8x8xf32> to vector<4x8x8xbf16>
    "tpu.trace_start"() <{level = 10 : i32, message = "hqk,hkd->hqd"}> : () -> ()
    %cst_31 = arith.constant dense<0.000000e+00> : vector<4x8x16xf32>
    %108 = tpu.matmul %107, %91, %cst_31 {dimension_numbers = #tpu.dot_dimension_numbers<[2], [1], [1], [2], [0, 0, 0, 1, 1, 2], [0], [0]>} : vector<4x8x8xbf16>, vector<4x8x16xbf16>, vector<4x8x16xf32> -> vector<4x8x16xf32>
    "tpu.trace_stop"() : () -> ()
    %109 = tpu.transpose %108, [1, 0, 2] : vector<4x8x16xf32> -> vector<8x4x16xf32>
    %110 = vector.shape_cast %109 : vector<8x4x16xf32> to vector<8x64xf32>
    %111 = tpu.concatenate %76, %110 in 0 : vector<8x64xf32>, vector<8x64xf32> -> vector<16x64xf32>
    %112 = arith.truncf %111 : vector<16x64xf32> to vector<16x64xbf16>
    %c0_32 = arith.constant 0 : index
    %c0_33 = arith.constant 0 : index
    %c0_34 = arith.constant 0 : index
    %113 = vector.load %arg7[%c0_32, %c0_33, %c0_34] : memref<1x64x64xbf16, #tpu.memory_space<vmem>>, vector<1x64x64xbf16>
    %114 = vector.shape_cast %113 : vector<1x64x64xbf16> to vector<64x64xbf16>
    %cst_35 = arith.constant dense<0.000000e+00> : vector<16x64xf32>
    %115 = tpu.matmul %112, %114, %cst_35 {dimension_numbers = #tpu.dot_dimension_numbers<[1], [0], [0], [1], [0, 0, 1, 1], [], []>} : vector<16x64xbf16>, vector<64x64xbf16>, vector<16x64xf32> -> vector<16x64xf32>
    %c0_36 = arith.constant 0 : index
    %c0_37 = arith.constant 0 : index
    %c0_38 = arith.constant 0 : index
    %116 = vector.load %arg8[%c0_36, %c0_37, %c0_38] : memref<1x1x64xf32, #tpu.memory_space<vmem>>, vector<1x1x64xf32>
    %117 = vector.shape_cast %116 : vector<1x1x64xf32> to vector<1x64xf32>
    %118 = vector.broadcast %117 : vector<1x64xf32> to vector<16x64xf32>
    %119 = arith.addf %115, %118 : vector<16x64xf32>
    %120 = arith.addf %4, %119 : vector<16x64xf32>
    %c0_39 = arith.constant 0 : index
    %c0_40 = arith.constant 0 : index
    %c0_41 = arith.constant 0 : index
    %121 = vector.load %arg9[%c0_39, %c0_40, %c0_41] : memref<1x1x64xf32, #tpu.memory_space<vmem>>, vector<1x1x64xf32>
    %122 = vector.shape_cast %121 : vector<1x1x64xf32> to vector<1x64xf32>
    %c0_42 = arith.constant 0 : index
    %c0_43 = arith.constant 0 : index
    %c0_44 = arith.constant 0 : index
    %123 = vector.load %arg10[%c0_42, %c0_43, %c0_44] : memref<1x1x64xf32, #tpu.memory_space<vmem>>, vector<1x1x64xf32>
    %124 = vector.shape_cast %123 : vector<1x1x64xf32> to vector<1x64xf32>
    %cst_45 = arith.constant dense<0.000000e+00> : vector<16xf32>
    %125 = vector.multi_reduction <add>, %120, %cst_45 [1] : vector<16x64xf32> to vector<16xf32>
    %126 = vector.shape_cast %125 : vector<16xf32> to vector<16x1xf32>
    %cst_46 = arith.constant 6.400000e+01 : f32
    %127 = vector.broadcast %cst_46 : f32 to vector<16x1xf32>
    %128 = arith.divf %126, %127 : vector<16x1xf32>
    %129 = arith.mulf %120, %120 : vector<16x64xf32>
    %cst_47 = arith.constant dense<0.000000e+00> : vector<16xf32>
    %130 = vector.multi_reduction <add>, %129, %cst_47 [1] : vector<16x64xf32> to vector<16xf32>
    %131 = vector.shape_cast %130 : vector<16xf32> to vector<16x1xf32>
    %cst_48 = arith.constant 6.400000e+01 : f32
    %132 = vector.broadcast %cst_48 : f32 to vector<16x1xf32>
    %133 = arith.divf %131, %132 : vector<16x1xf32>
    %134 = arith.mulf %128, %128 : vector<16x1xf32>
    %135 = arith.subf %133, %134 : vector<16x1xf32>
    %136 = vector.broadcast %128 : vector<16x1xf32> to vector<16x64xf32>
    %137 = arith.subf %120, %136 : vector<16x64xf32>
    %cst_49 = arith.constant 9.99999974E-6 : f32
    %138 = vector.broadcast %cst_49 : f32 to vector<16x1xf32>
    %139 = arith.addf %135, %138 : vector<16x1xf32>
    %140 = math.rsqrt %139 : vector<16x1xf32>
    %141 = vector.broadcast %140 : vector<16x1xf32> to vector<16x64xf32>
    %142 = arith.mulf %137, %141 : vector<16x64xf32>
    %143 = vector.broadcast %122 : vector<1x64xf32> to vector<16x64xf32>
    %144 = arith.mulf %142, %143 : vector<16x64xf32>
    %145 = vector.broadcast %124 : vector<1x64xf32> to vector<16x64xf32>
    %146 = arith.addf %144, %145 : vector<16x64xf32>
    %147 = arith.truncf %146 : vector<16x64xf32> to vector<16x64xbf16>
    %c0_50 = arith.constant 0 : index
    %c0_51 = arith.constant 0 : index
    %c0_52 = arith.constant 0 : index
    %148 = vector.load %arg11[%c0_50, %c0_51, %c0_52] : memref<1x64x256xbf16, #tpu.memory_space<vmem>>, vector<1x64x256xbf16>
    %149 = vector.shape_cast %148 : vector<1x64x256xbf16> to vector<64x256xbf16>
    %cst_53 = arith.constant dense<0.000000e+00> : vector<16x256xf32>
    %150 = tpu.matmul %147, %149, %cst_53 {dimension_numbers = #tpu.dot_dimension_numbers<[1], [0], [0], [1], [0, 0, 1, 1], [], []>} : vector<16x64xbf16>, vector<64x256xbf16>, vector<16x256xf32> -> vector<16x256xf32>
    %c0_54 = arith.constant 0 : index
    %c0_55 = arith.constant 0 : index
    %c0_56 = arith.constant 0 : index
    %151 = vector.load %arg12[%c0_54, %c0_55, %c0_56] : memref<1x1x256xf32, #tpu.memory_space<vmem>>, vector<1x1x256xf32>
    %152 = vector.shape_cast %151 : vector<1x1x256xf32> to vector<1x256xf32>
    %153 = vector.broadcast %152 : vector<1x256xf32> to vector<16x256xf32>
    %154 = arith.addf %150, %153 : vector<16x256xf32>
    %155 = arith.truncf %154 : vector<16x256xf32> to vector<16x256xbf16>
    %cst_57 = arith.constant 1.703130e+00 : bf16
    %156 = vector.broadcast %cst_57 : bf16 to vector<16x256xbf16>
    %157 = arith.mulf %156, %155 : vector<16x256xbf16>
    %158 = arith.negf %157 : vector<16x256xbf16>
    %159 = math.exp %158 : vector<16x256xbf16>
    %cst_58 = arith.constant 1.000000e+00 : bf16
    %160 = vector.broadcast %cst_58 : bf16 to vector<16x256xbf16>
    %161 = arith.addf %160, %159 : vector<16x256xbf16>
    %162 = arith.divf %160, %161 : vector<16x256xbf16>
    %163 = arith.mulf %155, %162 : vector<16x256xbf16>
    %c0_59 = arith.constant 0 : index
    %c0_60 = arith.constant 0 : index
    %c0_61 = arith.constant 0 : index
    %164 = vector.load %arg13[%c0_59, %c0_60, %c0_61] : memref<1x256x64xbf16, #tpu.memory_space<vmem>>, vector<1x256x64xbf16>
    %165 = vector.shape_cast %164 : vector<1x256x64xbf16> to vector<256x64xbf16>
    %cst_62 = arith.constant dense<0.000000e+00> : vector<16x64xf32>
    %166 = tpu.matmul %163, %165, %cst_62 {dimension_numbers = #tpu.dot_dimension_numbers<[1], [0], [0], [1], [0, 0, 1, 1], [], []>} : vector<16x256xbf16>, vector<256x64xbf16>, vector<16x64xf32> -> vector<16x64xf32>
    %c0_63 = arith.constant 0 : index
    %c0_64 = arith.constant 0 : index
    %c0_65 = arith.constant 0 : index
    %167 = vector.load %arg14[%c0_63, %c0_64, %c0_65] : memref<1x1x64xf32, #tpu.memory_space<vmem>>, vector<1x1x64xf32>
    %168 = vector.shape_cast %167 : vector<1x1x64xf32> to vector<1x64xf32>
    %169 = vector.broadcast %168 : vector<1x64xf32> to vector<16x64xf32>
    %170 = arith.addf %166, %169 : vector<16x64xf32>
    %171 = arith.addf %120, %170 : vector<16x64xf32>
    %c1_i32 = arith.constant 1 : i32
    %172 = arith.cmpi slt, %arg1, %c1_i32 : i32
    %173 = arith.extui %172 : i1 to i32
    %c0_i32_66 = arith.constant 0 : i32
    %174 = arith.cmpi ne, %173, %c0_i32_66 : i32
    scf.if %174 {
      %178 = vector.shape_cast %171 : vector<16x64xf32> to vector<2x8x64xf32>
      %c0_69 = arith.constant 0 : index
      %c0_70 = arith.constant 0 : index
      %c0_71 = arith.constant 0 : index
      %179 = vector.load %arg17[%c0_69, %c0_70, %c0_71] : memref<2x8x64xf32, #tpu.memory_space<vmem>>, vector<2x8x64xf32>
      tpu.vector_store %arg17[%c0_69, %c0_70, %c0_71], %178 {strides = array<i32>} : memref<2x8x64xf32, #tpu.memory_space<vmem>>, vector<2x8x64xf32>,
    } else {
    }
    %c1_i32_67 = arith.constant 1 : i32
    %175 = arith.cmpi eq, %arg1, %c1_i32_67 : i32
    %176 = arith.extui %175 : i1 to i32
    %c0_i32_68 = arith.constant 0 : i32
    %177 = arith.cmpi ne, %176, %c0_i32_68 : i32
    scf.if %177 {
      %c0_69 = arith.constant 0 : index
      %c0_70 = arith.constant 0 : index
      %178 = vector.load %arg15[%c0_69, %c0_70] : memref<1x64xf32, #tpu.memory_space<vmem>>, vector<1x64xf32>
      %c0_71 = arith.constant 0 : index
      %c0_72 = arith.constant 0 : index
      %179 = vector.load %arg16[%c0_71, %c0_72] : memref<1x64xf32, #tpu.memory_space<vmem>>, vector<1x64xf32>
      %cst_73 = arith.constant dense<0.000000e+00> : vector<16xf32>
      %180 = vector.multi_reduction <add>, %171, %cst_73 [1] : vector<16x64xf32> to vector<16xf32>
      %181 = vector.shape_cast %180 : vector<16xf32> to vector<16x1xf32>
      %cst_74 = arith.constant 6.400000e+01 : f32
      %182 = vector.broadcast %cst_74 : f32 to vector<16x1xf32>
      %183 = arith.divf %181, %182 : vector<16x1xf32>
      %184 = arith.mulf %171, %171 : vector<16x64xf32>
      %cst_75 = arith.constant dense<0.000000e+00> : vector<16xf32>
      %185 = vector.multi_reduction <add>, %184, %cst_75 [1] : vector<16x64xf32> to vector<16xf32>
      %186 = vector.shape_cast %185 : vector<16xf32> to vector<16x1xf32>
      %cst_76 = arith.constant 6.400000e+01 : f32
      %187 = vector.broadcast %cst_76 : f32 to vector<16x1xf32>
      %188 = arith.divf %186, %187 : vector<16x1xf32>
      %189 = arith.mulf %183, %183 : vector<16x1xf32>
      %190 = arith.subf %188, %189 : vector<16x1xf32>
      %191 = vector.broadcast %183 : vector<16x1xf32> to vector<16x64xf32>
      %192 = arith.subf %171, %191 : vector<16x64xf32>
      %cst_77 = arith.constant 9.99999974E-6 : f32
      %193 = vector.broadcast %cst_77 : f32 to vector<16x1xf32>
      %194 = arith.addf %190, %193 : vector<16x1xf32>
      %195 = math.rsqrt %194 : vector<16x1xf32>
      %196 = vector.broadcast %195 : vector<16x1xf32> to vector<16x64xf32>
      %197 = arith.mulf %192, %196 : vector<16x64xf32>
      %198 = vector.broadcast %178 : vector<1x64xf32> to vector<16x64xf32>
      %199 = arith.mulf %197, %198 : vector<16x64xf32>
      %200 = vector.broadcast %179 : vector<1x64xf32> to vector<16x64xf32>
      %201 = arith.addf %199, %200 : vector<16x64xf32>
      %202 = vector.shape_cast %201 : vector<16x64xf32> to vector<2x8x64xf32>
      %c0_78 = arith.constant 0 : index
      %c0_79 = arith.constant 0 : index
      %c0_80 = arith.constant 0 : index
      %203 = vector.load %arg17[%c0_78, %c0_79, %c0_80] : memref<2x8x64xf32, #tpu.memory_space<vmem>>, vector<2x8x64xf32>
      tpu.vector_store %arg17[%c0_78, %c0_79, %c0_80], %202 {strides = array<i32>} : memref<2x8x64xf32, #tpu.memory_space<vmem>>, vector<2x8x64xf32>,
    } else {
    }
    return
  }
  func.func @transform_0(%arg0: i32, %arg1: i32) -> (i32, i32, i32) {
    %c0_i32 = arith.constant 0 : i32
    %c0_i32_0 = arith.constant 0 : i32
    %c0_i32_1 = arith.constant 0 : i32
    return %arg0, %c0_i32, %c0_i32_0 : i32, i32, i32
  }
  func.func @transform_1(%arg0: i32, %arg1: i32) -> (i32, i32, i32) {
    %c0_i32 = arith.constant 0 : i32
    %c0_i32_0 = arith.constant 0 : i32
    %c0_i32_1 = arith.constant 0 : i32
    return %arg1, %c0_i32, %c0_i32_0 : i32, i32, i32
  }
  func.func @transform_2(%arg0: i32, %arg1: i32) -> (i32, i32, i32) {
    %c0_i32 = arith.constant 0 : i32
    %c0_i32_0 = arith.constant 0 : i32
    %c0_i32_1 = arith.constant 0 : i32
    return %arg1, %c0_i32, %c0_i32_0 : i32, i32, i32
  }
  func.func @transform_3(%arg0: i32, %arg1: i32) -> (i32, i32, i32) {
    %c0_i32 = arith.constant 0 : i32
    %c0_i32_0 = arith.constant 0 : i32
    %c0_i32_1 = arith.constant 0 : i32
    return %arg1, %c0_i32, %c0_i32_0 : i32, i32, i32
  }
  func.func @transform_4(%arg0: i32, %arg1: i32) -> (i32, i32, i32) {
    %c0_i32 = arith.constant 0 : i32
    %c0_i32_0 = arith.constant 0 : i32
    %c0_i32_1 = arith.constant 0 : i32
    return %arg1, %c0_i32, %c0_i32_0 : i32, i32, i32
  }
  func.func @transform_5(%arg0: i32, %arg1: i32) -> (i32, i32, i32) {
    %c0_i32 = arith.constant 0 : i32
    %c0_i32_0 = arith.constant 0 : i32
    %c0_i32_1 = arith.constant 0 : i32
    return %arg1, %c0_i32, %c0_i32_0 : i32, i32, i32
  }
  func.func @transform_6(%arg0: i32, %arg1: i32) -> (i32, i32, i32) {
    %c0_i32 = arith.constant 0 : i32
    %c0_i32_0 = arith.constant 0 : i32
    %c0_i32_1 = arith.constant 0 : i32
    return %arg1, %c0_i32, %c0_i32_0 : i32, i32, i32
  }
  func.func @transform_7(%arg0: i32, %arg1: i32) -> (i32, i32, i32) {
    %c0_i32 = arith.constant 0 : i32
    %c0_i32_0 = arith.constant 0 : i32
    %c0_i32_1 = arith.constant 0 : i32
    return %arg1, %c0_i32, %c0_i32_0 : i32, i32, i32
  }
  func.func @transform_8(%arg0: i32, %arg1: i32) -> (i32, i32, i32) {
    %c0_i32 = arith.constant 0 : i32
    %c0_i32_0 = arith.constant 0 : i32
    %c0_i32_1 = arith.constant 0 : i32
    return %arg1, %c0_i32, %c0_i32_0 : i32, i32, i32
  }
  func.func @transform_9(%arg0: i32, %arg1: i32) -> (i32, i32, i32) {
    %c0_i32 = arith.constant 0 : i32
    %c0_i32_0 = arith.constant 0 : i32
    %c0_i32_1 = arith.constant 0 : i32
    return %arg1, %c0_i32, %c0_i32_0 : i32, i32, i32
  }
  func.func @transform_10(%arg0: i32, %arg1: i32) -> (i32, i32, i32) {
    %c0_i32 = arith.constant 0 : i32
    %c0_i32_0 = arith.constant 0 : i32
    %c0_i32_1 = arith.constant 0 : i32
    return %arg1, %c0_i32, %c0_i32_0 : i32, i32, i32
  }
  func.func @transform_11(%arg0: i32, %arg1: i32) -> (i32, i32, i32) {
    %c0_i32 = arith.constant 0 : i32
    %c0_i32_0 = arith.constant 0 : i32
    %c0_i32_1 = arith.constant 0 : i32
    return %arg1, %c0_i32, %c0_i32_0 : i32, i32, i32
  }
  func.func @transform_12(%arg0: i32, %arg1: i32) -> (i32, i32, i32) {
    %c0_i32 = arith.constant 0 : i32
    %c0_i32_0 = arith.constant 0 : i32
    %c0_i32_1 = arith.constant 0 : i32
    return %arg1, %c0_i32, %c0_i32_0 : i32, i32, i32
  }
  func.func @transform_13(%arg0: i32, %arg1: i32) -> (i32, i32) {
    %c0_i32 = arith.constant 0 : i32
    %c0_i32_0 = arith.constant 0 : i32
    %c0_i32_1 = arith.constant 0 : i32
    return %c0_i32, %c0_i32_0 : i32, i32
  }
  func.func @transform_14(%arg0: i32, %arg1: i32) -> (i32, i32) {
    %c0_i32 = arith.constant 0 : i32
    %c0_i32_0 = arith.constant 0 : i32
    %c0_i32_1 = arith.constant 0 : i32
    return %c0_i32, %c0_i32_0 : i32, i32
  }
  func.func @transform_15(%arg0: i32, %arg1: i32) -> (i32, i32, i32) {
    %c0_i32 = arith.constant 0 : i32
    %c0_i32_0 = arith.constant 0 : i32
    %c0_i32_1 = arith.constant 0 : i32
    return %arg0, %c0_i32, %c0_i32_0 : i32, i32, i32
  }
}

</mosaic_0001>

<llo_original>
// kernel: clip_forward.1
$region0: #{clip_forward.1}
  #allocation0 [shape = 'u32[]', space=smem, size = 0x4, offset = 0x4, fixed_abs, tag = 'smem constant byte address 0x4 - core index']
  #allocation1 [shape = 'u32[72,128]{1,0:T(1,128)}', space=vmem, size = 0x9000, scoped, tag = 'internal scratch']
  %s0 = inlined_call_operand.vmem [shape: f32[4,8,64], index: 0, kind: input, shape index: {}]
  %s1 = inlined_call_operand.vmem [shape: f32[2,1,64], index: 1, kind: input, shape index: {}]
  %s2 = inlined_call_operand.vmem [shape: f32[2,1,64], index: 2, kind: input, shape index: {}]
  %s3 = inlined_call_operand.vmem [shape: bf16[2,64,192], index: 3, kind: input, shape index: {}]
  %s4 = inlined_call_operand.vmem [shape: f32[2,1,192], index: 4, kind: input, shape index: {}]
  %s5 = inlined_call_operand.vmem [shape: bf16[2,64,64], index: 5, kind: input, shape index: {}]
  %s6 = inlined_call_operand.vmem [shape: f32[2,1,64], index: 6, kind: input, shape index: {}]
  %s7 = inlined_call_operand.vmem [shape: f32[2,1,64], index: 7, kind: input, shape index: {}]
  %s8 = inlined_call_operand.vmem [shape: f32[2,1,64], index: 8, kind: input, shape index: {}]
  %s9 = inlined_call_operand.vmem [shape: bf16[2,64,256], index: 9, kind: input, shape index: {}]
  %s10 = inlined_call_operand.vmem [shape: f32[2,1,256], index: 10, kind: input, shape index: {}]
  %s11 = inlined_call_operand.vmem [shape: bf16[2,256,64], index: 11, kind: input, shape index: {}]
  %s12 = inlined_call_operand.vmem [shape: f32[2,1,64], index: 12, kind: input, shape index: {}]
  %s13 = inlined_call_operand.vmem [shape: f32[1,64], index: 13, kind: input, shape index: {}]
  %s14 = inlined_call_operand.vmem [shape: f32[1,64], index: 14, kind: input, shape index: {}]
  %s15 = inlined_call_operand.hbm [shape: f32[4,8,64], index: 15, kind: output, shape index: {}]
  %s16 = sld [smem:[#allocation0]]
  $region105: #{clip_forward.1} parent=0
    _
  %s18 = ssub.s32 1, %s16
  %s19 = scalar_select 0, %s18, %s16
  $region1: #{clip_forward.1} parent=0
    #allocation2 [shape = 'u8[16384]{0}', space=vmem, size = 0x4000, scoped, tag = 'output window, operand 0']
    #allocation3 [shape = 's32[2]{0}', space=sflag, size = 0x8, scoped, tag = 'scoped memory for clip_forward.1']
    %20 = vsyncpa [#allocation3], 0
    %s21 = scalar_lea.sflag [#allocation3], 1
    %22 = vsyncpa %s21, 0
    loop: start=0, step=1, limit=6
    $region2: #{clip_forward.1} parent=1 // loop_pre_header
      _
    $region3: #{clip_forward.1} parent=1 // loop_header
      %s24 = sphi 0, %s28
      %p25 = scmp.ge.s32.totalorder %s24, 6
      %s31 = sphi 0, %s43
      %s32 = sphi 0, %s39
      %s33 = sphi 0, %s31
      %s34 = sphi 0, %s32
      %s35 = sphi 0, %s33
      %s36 = sphi 0, %s34
      %s46 = sphi 0, %s48
      %s49 = sphi 0, %s46
      %s50 = sphi 0, %s49
      %s66 = sphi 0, %s50
      %s72 = sphi 0, %s74
      %s75 = sphi 0, %s72
      %s76 = sphi 0, %s75
      %s92 = sphi 0, %s76
      %s98 = sphi 0, %s100
      %s101 = sphi 0, %s98
      %s102 = sphi 0, %s101
      %s118 = sphi 0, %s102
      %s124 = sphi 0, %s126
      %s127 = sphi 0, %s124
      %s128 = sphi 0, %s127
      %s144 = sphi 0, %s128
      %s150 = sphi 0, %s152
      %s153 = sphi 0, %s150
      %s154 = sphi 0, %s153
      %s170 = sphi 0, %s154
      %s176 = sphi 0, %s178
      %s179 = sphi 0, %s176
      %s180 = sphi 0, %s179
      %s196 = sphi 0, %s180
      %s202 = sphi 0, %s204
      %s205 = sphi 0, %s202
      %s206 = sphi 0, %s205
      %s222 = sphi 0, %s206
      %s228 = sphi 0, %s230
      %s231 = sphi 0, %s228
      %s232 = sphi 0, %s231
      %s248 = sphi 0, %s232
      %s254 = sphi 0, %s256
      %s257 = sphi 0, %s254
      %s258 = sphi 0, %s257
      %s274 = sphi 0, %s258
      %s280 = sphi 0, %s282
      %s283 = sphi 0, %s280
      %s284 = sphi 0, %s283
      %s300 = sphi 0, %s284
      %s306 = sphi 0, %s308
      %s309 = sphi 0, %s306
      %s310 = sphi 0, %s309
      %s326 = sphi 0, %s310
      %s332 = sphi 0, %s334
      %s335 = sphi 0, %s332
      %s336 = sphi 0, %s335
      %s352 = sphi 0, %s336
      %s358 = sphi 0, %s360
      %s361 = sphi 0, %s358
      %s362 = sphi 0, %s361
      %s378 = sphi 0, %s362
      %s382 = sphi 0, %s382
      %s384 = sphi 0, %s382
      %s385 = sphi 0, %s384
      %s399 = sphi 0, %s385
      %s403 = sphi 0, %s403
      %s405 = sphi 0, %s403
      %s406 = sphi 0, %s405
      %s420 = sphi 0, %s406
      %s426 = sphi 0, %s428
      %s429 = sphi 0, %s426
      %s430 = sphi 0, %s429
      %s446 = sphi 0, %s430
    $region4: #{clip_forward.1} parent=1 // loop_header_branch
      %27 = sbr.rel (%p25) target = $region8
    $region5: #{clip_forward.1} parent=1 // loop_body
      %s29 = ssub.s32 %s24, 1
      %s30 = ssub.s32 %s24, 2
      %s37 = sadd.s32 1, %s32
      %p38 = scmp.ge.s32.totalorder %s37, 2
      %s39 = scalar_select %p38, 0, %s37
      %s40 = sadd.s32 1, %s31
      %s41 = scalar_select %p38, %s40, %s31
      %p42 = scmp.ge.s32.totalorder %s41, 2
      %s43 = scalar_select %p42, 0, %s41
      %s44 = ssub.s32 %s31, %s43
      %p45 = scmp.eq.s32.totalorder %s44, 0
      %s47 = sadd.s32 %s46, 1
      %s48 = scalar_select %p45, %s46, %s47
      %p51 = pneg %p45
      %p52 = scmp.eq.s32.totalorder %s24, 3
      %p53 = por %p51, %p52
      %p54 = scmp.ne.s32.totalorder %s46, %s49
      %p55 = scmp.eq.s32.totalorder %s24, 0
      %p56 = por %p54, %p55
      %p57 = scmp.ne.s32.totalorder %s46, %s49
      %p58 = scmp.eq.s32.totalorder %s29, 3
      %p59 = por %p57, %p58
      %p60 = scmp.ne.s32.totalorder %s49, %s50
      %p61 = scmp.eq.s32.totalorder %s29, 0
      %p62 = por %p60, %p61
      %p63 = scmp.ne.s32.totalorder %s49, %s50
      %p64 = scmp.eq.s32.totalorder %s30, 3
      %p65 = por %p63, %p64
      %p67 = scmp.ne.s32.totalorder %s50, %s66
      %p68 = scmp.eq.s32.totalorder %s30, 0
      %p69 = por %p67, %p68
      %s70 = ssub.s32 %s32, %s39
      %p71 = scmp.eq.s32.totalorder %s70, 0
      %s73 = sadd.s32 %s72, 1
      %s74 = scalar_select %p71, %s72, %s73
      %p77 = pneg %p71
      %p78 = scmp.eq.s32.totalorder %s24, 3
      %p79 = por %p77, %p78
      %p80 = scmp.ne.s32.totalorder %s72, %s75
      %p81 = scmp.eq.s32.totalorder %s24, 0
      %p82 = por %p80, %p81
      %p83 = scmp.ne.s32.totalorder %s72, %s75
      %p84 = scmp.eq.s32.totalorder %s29, 3
      %p85 = por %p83, %p84
      %p86 = scmp.ne.s32.totalorder %s75, %s76
      %p87 = scmp.eq.s32.totalorder %s29, 0
      %p88 = por %p86, %p87
      %p89 = scmp.ne.s32.totalorder %s75, %s76
      %p90 = scmp.eq.s32.totalorder %s30, 3
      %p91 = por %p89, %p90
      %p93 = scmp.ne.s32.totalorder %s76, %s92
      %p94 = scmp.eq.s32.totalorder %s30, 0
      %p95 = por %p93, %p94
      %s96 = ssub.s32 %s32, %s39
      %p97 = scmp.eq.s32.totalorder %s96, 0
      %s99 = sadd.s32 %s98, 1
      %s100 = scalar_select %p97, %s98, %s99
      %p103 = pneg %p97
      %p104 = scmp.eq.s32.totalorder %s24, 3
      %p105 = por %p103, %p104
      %p106 = scmp.ne.s32.totalorder %s98, %s101
      %p107 = scmp.eq.s32.totalorder %s24, 0
      %p108 = por %p106, %p107
      %p109 = scmp.ne.s32.totalorder %s98, %s101
      %p110 = scmp.eq.s32.totalorder %s29, 3
      %p111 = por %p109, %p110
      %p112 = scmp.ne.s32.totalorder %s101, %s102
      %p113 = scmp.eq.s32.totalorder %s29, 0
      %p114 = por %p112, %p113
      %p115 = scmp.ne.s32.totalorder %s101, %s102
      %p116 = scmp.eq.s32.totalorder %s30, 3
      %p117 = por %p115, %p116
      %p119 = scmp.ne.s32.totalorder %s102, %s118
      %p120 = scmp.eq.s32.totalorder %s30, 0
      %p121 = por %p119, %p120
      %s122 = ssub.s32 %s32, %s39
      %p123 = scmp.eq.s32.totalorder %s122, 0
      %s125 = sadd.s32 %s124, 1
      %s126 = scalar_select %p123, %s124, %s125
      %p129 = pneg %p123
      %p130 = scmp.eq.s32.totalorder %s24, 3
      %p131 = por %p129, %p130
      %p132 = scmp.ne.s32.totalorder %s124, %s127
      %p133 = scmp.eq.s32.totalorder %s24, 0
      %p134 = por %p132, %p133
      %p135 = scmp.ne.s32.totalorder %s124, %s127
      %p136 = scmp.eq.s32.totalorder %s29, 3
      %p137 = por %p135, %p136
      %p138 = scmp.ne.s32.totalorder %s127, %s128
      %p139 = scmp.eq.s32.totalorder %s29, 0
      %p140 = por %p138, %p139
      %p141 = scmp.ne.s32.totalorder %s127, %s128
      %p142 = scmp.eq.s32.totalorder %s30, 3
      %p143 = por %p141, %p142
      %p145 = scmp.ne.s32.totalorder %s128, %s144
      %p146 = scmp.eq.s32.totalorder %s30, 0
      %p147 = por %p145, %p146
      %s148 = ssub.s32 %s32, %s39
      %p149 = scmp.eq.s32.totalorder %s148, 0
      %s151 = sadd.s32 %s150, 1
      %s152 = scalar_select %p149, %s150, %s151
      %p155 = pneg %p149
      %p156 = scmp.eq.s32.totalorder %s24, 3
      %p157 = por %p155, %p156
      %p158 = scmp.ne.s32.totalorder %s150, %s153
      %p159 = scmp.eq.s32.totalorder %s24, 0
      %p160 = por %p158, %p159
      %p161 = scmp.ne.s32.totalorder %s150, %s153
      %p162 = scmp.eq.s32.totalorder %s29, 3
      %p163 = por %p161, %p162
      %p164 = scmp.ne.s32.totalorder %s153, %s154
      %p165 = scmp.eq.s32.totalorder %s29, 0
      %p166 = por %p164, %p165
      %p167 = scmp.ne.s32.totalorder %s153, %s154
      %p168 = scmp.eq.s32.totalorder %s30, 3
      %p169 = por %p167, %p168
      %p171 = scmp.ne.s32.totalorder %s154, %s170
      %p172 = scmp.eq.s32.totalorder %s30, 0
      %p173 = por %p171, %p172
      %s174 = ssub.s32 %s32, %s39
      %p175 = scmp.eq.s32.totalorder %s174, 0
      %s177 = sadd.s32 %s176, 1
      %s178 = scalar_select %p175, %s176, %s177
      %p181 = pneg %p175
      %p182 = scmp.eq.s32.totalorder %s24, 3
      %p183 = por %p181, %p182
      %p184 = scmp.ne.s32.totalorder %s176, %s179
      %p185 = scmp.eq.s32.totalorder %s24, 0
      %p186 = por %p184, %p185
      %p187 = scmp.ne.s32.totalorder %s176, %s179
      %p188 = scmp.eq.s32.totalorder %s29, 3
      %p189 = por %p187, %p188
      %p190 = scmp.ne.s32.totalorder %s179, %s180
      %p191 = scmp.eq.s32.totalorder %s29, 0
      %p192 = por %p190, %p191
      %p193 = scmp.ne.s32.totalorder %s179, %s180
      %p194 = scmp.eq.s32.totalorder %s30, 3
      %p195 = por %p193, %p194
      %p197 = scmp.ne.s32.totalorder %s180, %s196
      %p198 = scmp.eq.s32.totalorder %s30, 0
      %p199 = por %p197, %p198
      %s200 = ssub.s32 %s32, %s39
      %p201 = scmp.eq.s32.totalorder %s200, 0
      %s203 = sadd.s32 %s202, 1
      %s204 = scalar_select %p201, %s202, %s203
      %p207 = pneg %p201
      %p208 = scmp.eq.s32.totalorder %s24, 3
      %p209 = por %p207, %p208
      %p210 = scmp.ne.s32.totalorder %s202, %s205
      %p211 = scmp.eq.s32.totalorder %s24, 0
      %p212 = por %p210, %p211
      %p213 = scmp.ne.s32.totalorder %s202, %s205
      %p214 = scmp.eq.s32.totalorder %s29, 3
      %p215 = por %p213, %p214
      %p216 = scmp.ne.s32.totalorder %s205, %s206
      %p217 = scmp.eq.s32.totalorder %s29, 0
      %p218 = por %p216, %p217
      %p219 = scmp.ne.s32.totalorder %s205, %s206
      %p220 = scmp.eq.s32.totalorder %s30, 3
      %p221 = por %p219, %p220
      %p223 = scmp.ne.s32.totalorder %s206, %s222
      %p224 = scmp.eq.s32.totalorder %s30, 0
      %p225 = por %p223, %p224
      %s226 = ssub.s32 %s32, %s39
      %p227 = scmp.eq.s32.totalorder %s226, 0
      %s229 = sadd.s32 %s228, 1
      %s230 = scalar_select %p227, %s228, %s229
      %p233 = pneg %p227
      %p234 = scmp.eq.s32.totalorder %s24, 3
      %p235 = por %p233, %p234
      %p236 = scmp.ne.s32.totalorder %s228, %s231
      %p237 = scmp.eq.s32.totalorder %s24, 0
      %p238 = por %p236, %p237
      %p239 = scmp.ne.s32.totalorder %s228, %s231
      %p240 = scmp.eq.s32.totalorder %s29, 3
      %p241 = por %p239, %p240
      %p242 = scmp.ne.s32.totalorder %s231, %s232
      %p243 = scmp.eq.s32.totalorder %s29, 0
      %p244 = por %p242, %p243
      %p245 = scmp.ne.s32.totalorder %s231, %s232
      %p246 = scmp.eq.s32.totalorder %s30, 3
      %p247 = por %p245, %p246
      %p249 = scmp.ne.s32.totalorder %s232, %s248
      %p250 = scmp.eq.s32.totalorder %s30, 0
      %p251 = por %p249, %p250
      %s252 = ssub.s32 %s32, %s39
      %p253 = scmp.eq.s32.totalorder %s252, 0
      %s255 = sadd.s32 %s254, 1
      %s256 = scalar_select %p253, %s254, %s255
      %p259 = pneg %p253
      %p260 = scmp.eq.s32.totalorder %s24, 3
      %p261 = por %p259, %p260
      %p262 = scmp.ne.s32.totalorder %s254, %s257
      %p263 = scmp.eq.s32.totalorder %s24, 0
      %p264 = por %p262, %p263
      %p265 = scmp.ne.s32.totalorder %s254, %s257
      %p266 = scmp.eq.s32.totalorder %s29, 3
      %p267 = por %p265, %p266
      %p268 = scmp.ne.s32.totalorder %s257, %s258
      %p269 = scmp.eq.s32.totalorder %s29, 0
      %p270 = por %p268, %p269
      %p271 = scmp.ne.s32.totalorder %s257, %s258
      %p272 = scmp.eq.s32.totalorder %s30, 3
      %p273 = por %p271, %p272
      %p275 = scmp.ne.s32.totalorder %s258, %s274
      %p276 = scmp.eq.s32.totalorder %s30, 0
      %p277 = por %p275, %p276
      %s278 = ssub.s32 %s32, %s39
      %p279 = scmp.eq.s32.totalorder %s278, 0
      %s281 = sadd.s32 %s280, 1
      %s282 = scalar_select %p279, %s280, %s281
      %p285 = pneg %p279
      %p286 = scmp.eq.s32.totalorder %s24, 3
      %p287 = por %p285, %p286
      %p288 = scmp.ne.s32.totalorder %s280, %s283
      %p289 = scmp.eq.s32.totalorder %s24, 0
      %p290 = por %p288, %p289
      %p291 = scmp.ne.s32.totalorder %s280, %s283
      %p292 = scmp.eq.s32.totalorder %s29, 3
      %p293 = por %p291, %p292
      %p294 = scmp.ne.s32.totalorder %s283, %s284
      %p295 = scmp.eq.s32.totalorder %s29, 0
      %p296 = por %p294, %p295
      %p297 = scmp.ne.s32.totalorder %s283, %s284
      %p298 = scmp.eq.s32.totalorder %s30, 3
      %p299 = por %p297, %p298
      %p301 = scmp.ne.s32.totalorder %s284, %s300
      %p302 = scmp.eq.s32.totalorder %s30, 0
      %p303 = por %p301, %p302
      %s304 = ssub.s32 %s32, %s39
      %p305 = scmp.eq.s32.totalorder %s304, 0
      %s307 = sadd.s32 %s306, 1
      %s308 = scalar_select %p305, %s306, %s307
      %p311 = pneg %p305
      %p312 = scmp.eq.s32.totalorder %s24, 3
      %p313 = por %p311, %p312
      %p314 = scmp.ne.s32.totalorder %s306, %s309
      %p315 = scmp.eq.s32.totalorder %s24, 0
      %p316 = por %p314, %p315
      %p317 = scmp.ne.s32.totalorder %s306, %s309
      %p318 = scmp.eq.s32.totalorder %s29, 3
      %p319 = por %p317, %p318
      %p320 = scmp.ne.s32.totalorder %s309, %s310
      %p321 = scmp.eq.s32.totalorder %s29, 0
      %p322 = por %p320, %p321
      %p323 = scmp.ne.s32.totalorder %s309, %s310
      %p324 = scmp.eq.s32.totalorder %s30, 3
      %p325 = por %p323, %p324
      %p327 = scmp.ne.s32.totalorder %s310, %s326
      %p328 = scmp.eq.s32.totalorder %s30, 0
      %p329 = por %p327, %p328
      %s330 = ssub.s32 %s32, %s39
      %p331 = scmp.eq.s32.totalorder %s330, 0
      %s333 = sadd.s32 %s332, 1
      %s334 = scalar_select %p331, %s332, %s333
      %p337 = pneg %p331
      %p338 = scmp.eq.s32.totalorder %s24, 3
      %p339 = por %p337, %p338
      %p340 = scmp.ne.s32.totalorder %s332, %s335
      %p341 = scmp.eq.s32.totalorder %s24, 0
      %p342 = por %p340, %p341
      %p343 = scmp.ne.s32.totalorder %s332, %s335
      %p344 = scmp.eq.s32.totalorder %s29, 3
      %p345 = por %p343, %p344
      %p346 = scmp.ne.s32.totalorder %s335, %s336
      %p347 = scmp.eq.s32.totalorder %s29, 0
      %p348 = por %p346, %p347
      %p349 = scmp.ne.s32.totalorder %s335, %s336
      %p350 = scmp.eq.s32.totalorder %s30, 3
      %p351 = por %p349, %p350
      %p353 = scmp.ne.s32.totalorder %s336, %s352
      %p354 = scmp.eq.s32.totalorder %s30, 0
      %p355 = por %p353, %p354
      %s356 = ssub.s32 %s32, %s39
      %p357 = scmp.eq.s32.totalorder %s356, 0
      %s359 = sadd.s32 %s358, 1
      %s360 = scalar_select %p357, %s358, %s359
      %p363 = pneg %p357
      %p364 = scmp.eq.s32.totalorder %s24, 3
      %p365 = por %p363, %p364
      %p366 = scmp.ne.s32.totalorder %s358, %s361
      %p367 = scmp.eq.s32.totalorder %s24, 0
      %p368 = por %p366, %p367
      %p369 = scmp.ne.s32.totalorder %s358, %s361
      %p370 = scmp.eq.s32.totalorder %s29, 3
      %p371 = por %p369, %p370
      %p372 = scmp.ne.s32.totalorder %s361, %s362
      %p373 = scmp.eq.s32.totalorder %s29, 0
      %p374 = por %p372, %p373
      %p375 = scmp.ne.s32.totalorder %s361, %s362
      %p376 = scmp.eq.s32.totalorder %s30, 3
      %p377 = por %p375, %p376
      %p379 = scmp.ne.s32.totalorder %s362, %s378
      %p380 = scmp.eq.s32.totalorder %s30, 0
      %p381 = por %p379, %p380
      %s383 = sadd.s32 %s382, 1
      %p386 = scmp.eq.s32.totalorder %s24, 3
      %p387 = scmp.ne.s32.totalorder %s382, %s384
      %p388 = scmp.eq.s32.totalorder %s24, 0
      %p389 = por %p387, %p388
      %p390 = scmp.ne.s32.totalorder %s382, %s384
      %p391 = scmp.eq.s32.totalorder %s29, 3
      %p392 = por %p390, %p391
      %p393 = scmp.ne.s32.totalorder %s384, %s385
      %p394 = scmp.eq.s32.totalorder %s29, 0
      %p395 = por %p393, %p394
      %p396 = scmp.ne.s32.totalorder %s384, %s385
      %p397 = scmp.eq.s32.totalorder %s30, 3
      %p398 = por %p396, %p397
      %p400 = scmp.ne.s32.totalorder %s385, %s399
      %p401 = scmp.eq.s32.totalorder %s30, 0
      %p402 = por %p400, %p401
      %s404 = sadd.s32 %s403, 1
      %p407 = scmp.eq.s32.totalorder %s24, 3
      %p408 = scmp.ne.s32.totalorder %s403, %s405
      %p409 = scmp.eq.s32.totalorder %s24, 0
      %p410 = por %p408, %p409
      %p411 = scmp.ne.s32.totalorder %s403, %s405
      %p412 = scmp.eq.s32.totalorder %s29, 3
      %p413 = por %p411, %p412
      %p414 = scmp.ne.s32.totalorder %s405, %s406
      %p415 = scmp.eq.s32.totalorder %s29, 0
      %p416 = por %p414, %p415
      %p417 = scmp.ne.s32.totalorder %s405, %s406
      %p418 = scmp.eq.s32.totalorder %s30, 3
      %p419 = por %p417, %p418
      %p421 = scmp.ne.s32.totalorder %s406, %s420
      %p422 = scmp.eq.s32.totalorder %s30, 0
      %p423 = por %p421, %p422
      %s424 = ssub.s32 %s31, %s43
      %p425 = scmp.eq.s32.totalorder %s424, 0
      %s427 = sadd.s32 %s426, 1
      %s428 = scalar_select %p425, %s426, %s427
      %p431 = pneg %p425
      %p432 = scmp.eq.s32.totalorder %s24, 3
      %p433 = por %p431, %p432
      %p434 = scmp.ne.s32.totalorder %s426, %s429
      %p435 = scmp.eq.s32.totalorder %s24, 0
      %p436 = por %p434, %p435
      %p437 = scmp.ne.s32.totalorder %s426, %s429
      %p438 = scmp.eq.s32.totalorder %s29, 3
      %p439 = por %p437, %p438
      %p440 = scmp.ne.s32.totalorder %s429, %s430
      %p441 = scmp.eq.s32.totalorder %s29, 0
      %p442 = por %p440, %p441
      %p443 = scmp.ne.s32.totalorder %s429, %s430
      %p444 = scmp.eq.s32.totalorder %s30, 3
      %p445 = por %p443, %p444
      %p447 = scmp.ne.s32.totalorder %s430, %s446
      %p448 = scmp.eq.s32.totalorder %s30, 0
      %p449 = por %p447, %p448
      %p450 = scmp.le.s32.totalorder 1, %s24
      %p451 = scmp.lt.s32.totalorder %s24, 5
      %p452 = pnand %p450, %p451
      %p453 = pneg %p452
      // Predicated region
      $region9: #{clip_forward.1} parent=5 // pred_check
        _
      $region10: #{clip_forward.1} parent=5 // pred_check_branch
        %455 = sbr.rel (%p452) target = $region12
      $region11: #{clip_forward.1} parent=5 // pred_region
        %s456 = ssub.s32 %s24, 1
        // Predicated region
        $region13: #{clip_forward.1} parent=11 // pred_check
          %p457 = pneg %p395
        $region14: #{clip_forward.1} parent=11 // pred_check_branch
          %459 = sbr.rel (%p457) target = $region16
        $region15: #{clip_forward.1} parent=11 // pred_region
          _
        $region16: #{clip_forward.1} parent=11 // pred_fallthru
          _
        // Predicated region
        $region17: #{clip_forward.1} parent=11 // pred_check
          %p460 = pneg %p416
        $region18: #{clip_forward.1} parent=11 // pred_check_branch
          %462 = sbr.rel (%p460) target = $region20
        $region19: #{clip_forward.1} parent=11 // pred_region
          _
        $region20: #{clip_forward.1} parent=11 // pred_fallthru
          _
      $region12: #{clip_forward.1} parent=5 // pred_fallthru
        _
      %p463 = scmp.lt.s32.totalorder %s24, 4
      // Predicated region
      $region21: #{clip_forward.1} parent=5 // pred_check
        %p464 = pneg %p463
      $region22: #{clip_forward.1} parent=5 // pred_check_branch
        %466 = sbr.rel (%p464) target = $region24
      $region23: #{clip_forward.1} parent=5 // pred_region
        // Predicated region
        $region25: #{clip_forward.1} parent=23 // pred_check
          %p467 = pneg %p56
        $region26: #{clip_forward.1} parent=23 // pred_check_branch
          %469 = sbr.rel (%p467) target = $region28
        $region27: #{clip_forward.1} parent=23 // pred_region
          %s470 = smul.u32 2, %s31
          %p471 = scmp.lt.s32.totalorder %s470, 3
          %s472 = scalar_select %p471, %s470, 3
          %s473 = smul.addr %s472, 8
          %s474 = scalar_lea.vmem %s0, %s473
          %s475 = smul.u32 2, %s31
        $region28: #{clip_forward.1} parent=23 // pred_fallthru
          _
        // Predicated region
        $region29: #{clip_forward.1} parent=23 // pred_check
          %p476 = pneg %p82
        $region30: #{clip_forward.1} parent=23 // pred_check_branch
          %478 = sbr.rel (%p476) target = $region32
        $region31: #{clip_forward.1} parent=23 // pred_region
          %p479 = scmp.lt.s32.totalorder %s32, 1
          %s480 = scalar_select %p479, %s32, 1
          %s481 = scalar_lea.vmem %s1, %s480
        $region32: #{clip_forward.1} parent=23 // pred_fallthru
          _
        // Predicated region
        $region33: #{clip_forward.1} parent=23 // pred_check
          %p482 = pneg %p108
        $region34: #{clip_forward.1} parent=23 // pred_check_branch
          %484 = sbr.rel (%p482) target = $region36
        $region35: #{clip_forward.1} parent=23 // pred_region
          %p485 = scmp.lt.s32.totalorder %s32, 1
          %s486 = scalar_select %p485, %s32, 1
          %s487 = scalar_lea.vmem %s2, %s486
        $region36: #{clip_forward.1} parent=23 // pred_fallthru
          _
        // Predicated region
        $region37: #{clip_forward.1} parent=23 // pred_check
          %p488 = pneg %p134
        $region38: #{clip_forward.1} parent=23 // pred_check_branch
          %490 = sbr.rel (%p488) target = $region40
        $region39: #{clip_forward.1} parent=23 // pred_region
          %p491 = scmp.lt.s32.totalorder %s32, 1
          %s492 = scalar_select %p491, %s32, 1
          %s493 = smul.addr %s492, 16
          %s494 = smul.addr %s493, 4
          %s495 = scalar_lea.vmem %s3, %s494
        $region40: #{clip_forward.1} parent=23 // pred_fallthru
          _
        // Predicated region
        $region41: #{clip_forward.1} parent=23 // pred_check
          %p496 = pneg %p160
        $region42: #{clip_forward.1} parent=23 // pred_check_branch
          %498 = sbr.rel (%p496) target = $region44
        $region43: #{clip_forward.1} parent=23 // pred_region
          %p499 = scmp.lt.s32.totalorder %s32, 1
          %s500 = scalar_select %p499, %s32, 1
          %s501 = smul.addr %s500, 2
          %s502 = scalar_lea.vmem %s4, %s501
        $region44: #{clip_forward.1} parent=23 // pred_fallthru
          _
        // Predicated region
        $region45: #{clip_forward.1} parent=23 // pred_check
          %p503 = pneg %p186
        $region46: #{clip_forward.1} parent=23 // pred_check_branch
          %505 = sbr.rel (%p503) target = $region48
        $region47: #{clip_forward.1} parent=23 // pred_region
          %p506 = scmp.lt.s32.totalorder %s32, 1
          %s507 = scalar_select %p506, %s32, 1
          %s508 = smul.addr %s507, 8
          %s509 = smul.addr %s508, 4
          %s510 = scalar_lea.vmem %s5, %s509
        $region48: #{clip_forward.1} parent=23 // pred_fallthru
          _
        // Predicated region
        $region49: #{clip_forward.1} parent=23 // pred_check
          %p511 = pneg %p212
        $region50: #{clip_forward.1} parent=23 // pred_check_branch
          %513 = sbr.rel (%p511) target = $region52
        $region51: #{clip_forward.1} parent=23 // pred_region
          %p514 = scmp.lt.s32.totalorder %s32, 1
          %s515 = scalar_select %p514, %s32, 1
          %s516 = scalar_lea.vmem %s6, %s515
        $region52: #{clip_forward.1} parent=23 // pred_fallthru
          _
        // Predicated region
        $region53: #{clip_forward.1} parent=23 // pred_check
          %p517 = pneg %p238
        $region54: #{clip_forward.1} parent=23 // pred_check_branch
          %519 = sbr.rel (%p517) target = $region56
        $region55: #{clip_forward.1} parent=23 // pred_region
          %p520 = scmp.lt.s32.totalorder %s32, 1
          %s521 = scalar_select %p520, %s32, 1
          %s522 = scalar_lea.vmem %s7, %s521
        $region56: #{clip_forward.1} parent=23 // pred_fallthru
          _
        // Predicated region
        $region57: #{clip_forward.1} parent=23 // pred_check
          %p523 = pneg %p264
        $region58: #{clip_forward.1} parent=23 // pred_check_branch
          %525 = sbr.rel (%p523) target = $region60
        $region59: #{clip_forward.1} parent=23 // pred_region
          %p526 = scmp.lt.s32.totalorder %s32, 1
          %s527 = scalar_select %p526, %s32, 1
          %s528 = scalar_lea.vmem %s8, %s527
        $region60: #{clip_forward.1} parent=23 // pred_fallthru
          _
        // Predicated region
        $region61: #{clip_forward.1} parent=23 // pred_check
          %p529 = pneg %p290
        $region62: #{clip_forward.1} parent=23 // pred_check_branch
          %531 = sbr.rel (%p529) target = $region64
        $region63: #{clip_forward.1} parent=23 // pred_region
          %p532 = scmp.lt.s32.totalorder %s32, 1
          %s533 = scalar_select %p532, %s32, 1
          %s534 = smul.addr %s533, 16
          %s535 = smul.addr %s534, 4
          %s536 = scalar_lea.vmem %s9, %s535
        $region64: #{clip_forward.1} parent=23 // pred_fallthru
          _
        // Predicated region
        $region65: #{clip_forward.1} parent=23 // pred_check
          %p537 = pneg %p316
        $region66: #{clip_forward.1} parent=23 // pred_check_branch
          %539 = sbr.rel (%p537) target = $region68
        $region67: #{clip_forward.1} parent=23 // pred_region
          %p540 = scmp.lt.s32.totalorder %s32, 1
          %s541 = scalar_select %p540, %s32, 1
          %s542 = smul.addr %s541, 2
          %s543 = scalar_lea.vmem %s10, %s542
        $region68: #{clip_forward.1} parent=23 // pred_fallthru
          _
        // Predicated region
        $region69: #{clip_forward.1} parent=23 // pred_check
          %p544 = pneg %p342
        $region70: #{clip_forward.1} parent=23 // pred_check_branch
          %546 = sbr.rel (%p544) target = $region72
        $region71: #{clip_forward.1} parent=23 // pred_region
          %p547 = scmp.lt.s32.totalorder %s32, 1
          %s548 = scalar_select %p547, %s32, 1
          %s549 = smul.addr %s548, 32
          %s550 = smul.addr %s549, 4
          %s551 = scalar_lea.vmem %s11, %s550
        $region72: #{clip_forward.1} parent=23 // pred_fallthru
          _
        // Predicated region
        $region73: #{clip_forward.1} parent=23 // pred_check
          %p552 = pneg %p368
        $region74: #{clip_forward.1} parent=23 // pred_check_branch
          %554 = sbr.rel (%p552) target = $region76
        $region75: #{clip_forward.1} parent=23 // pred_region
          %p555 = scmp.lt.s32.totalorder %s32, 1
          %s556 = scalar_select %p555, %s32, 1
          %s557 = scalar_lea.vmem %s12, %s556
        $region76: #{clip_forward.1} parent=23 // pred_fallthru
          _
      $region24: #{clip_forward.1} parent=5 // pred_fallthru
        _
      %p558 = scmp.le.s32.totalorder 1, %s24
      %p559 = scmp.lt.s32.totalorder %s24, 5
      %p560 = pnand %p558, %p559
      %p561 = pneg %p560
      // Predicated region
      $region77: #{clip_forward.1} parent=5 // pred_check
        _
      $region78: #{clip_forward.1} parent=5 // pred_check_branch
        %563 = sbr.rel (%p560) target = $region80
      $region79: #{clip_forward.1} parent=5 // pred_region
        %s564 = ssub.s32 %s24, 1
        %s565 = smul.u32 2, %s33
        %p566 = scmp.lt.s32.totalorder %s565, 3
        %s567 = scalar_select %p566, %s565, 3
        %s568 = smul.addr %s567, 8
        %s569 = scalar_lea.vmem %s0, %s568
        %p570 = pneg %p62
        %p571 = pneg %p59
        %p572 = scmp.lt.s32.totalorder %s34, 1
        %s573 = scalar_select %p572, %s34, 1
        %s574 = scalar_lea.vmem %s1, %s573
        %p575 = pneg %p88
        %p576 = pneg %p85
        %p577 = scmp.lt.s32.totalorder %s34, 1
        %s578 = scalar_select %p577, %s34, 1
        %s579 = scalar_lea.vmem %s2, %s578
        %p580 = pneg %p114
        %p581 = pneg %p111
        %p582 = scmp.lt.s32.totalorder %s34, 1
        %s583 = scalar_select %p582, %s34, 1
        %s584 = smul.addr %s583, 16
        %s585 = smul.addr %s584, 4
        %s586 = scalar_lea.vmem %s3, %s585
        %p587 = pneg %p140
        %p588 = pneg %p137
        %p589 = scmp.lt.s32.totalorder %s34, 1
        %s590 = scalar_select %p589, %s34, 1
        %s591 = smul.addr %s590, 2
        %s592 = scalar_lea.vmem %s4, %s591
        %p593 = pneg %p166
        %p594 = pneg %p163
        %p595 = scmp.lt.s32.totalorder %s34, 1
        %s596 = scalar_select %p595, %s34, 1
        %s597 = smul.addr %s596, 8
        %s598 = smul.addr %s597, 4
        %s599 = scalar_lea.vmem %s5, %s598
        %p600 = pneg %p192
        %p601 = pneg %p189
        %p602 = scmp.lt.s32.totalorder %s34, 1
        %s603 = scalar_select %p602, %s34, 1
        %s604 = scalar_lea.vmem %s6, %s603
        %p605 = pneg %p218
        %p606 = pneg %p215
        %p607 = scmp.lt.s32.totalorder %s34, 1
        %s608 = scalar_select %p607, %s34, 1
        %s609 = scalar_lea.vmem %s7, %s608
        %p610 = pneg %p244
        %p611 = pneg %p241
        %p612 = scmp.lt.s32.totalorder %s34, 1
        %s613 = scalar_select %p612, %s34, 1
        %s614 = scalar_lea.vmem %s8, %s613
        %p615 = pneg %p270
        %p616 = pneg %p267
        %p617 = scmp.lt.s32.totalorder %s34, 1
        %s618 = scalar_select %p617, %s34, 1
        %s619 = smul.addr %s618, 16
        %s620 = smul.addr %s619, 4
        %s621 = scalar_lea.vmem %s9, %s620
        %p622 = pneg %p296
        %p623 = pneg %p293
        %p624 = scmp.lt.s32.totalorder %s34, 1
        %s625 = scalar_select %p624, %s34, 1
        %s626 = smul.addr %s625, 2
        %s627 = scalar_lea.vmem %s10, %s626
        %p628 = pneg %p322
        %p629 = pneg %p319
        %p630 = scmp.lt.s32.totalorder %s34, 1
        %s631 = scalar_select %p630, %s34, 1
        %s632 = smul.addr %s631, 32
        %s633 = smul.addr %s632, 4
        %s634 = scalar_lea.vmem %s11, %s633
        %p635 = pneg %p348
        %p636 = pneg %p345
        %p637 = scmp.lt.s32.totalorder %s34, 1
        %s638 = scalar_select %p637, %s34, 1
        %s639 = scalar_lea.vmem %s12, %s638
        %p640 = pneg %p374
        %p641 = pneg %p371
        %p642 = pneg %p395
        %p643 = pneg %p392
        %p644 = pneg %p416
        %p645 = pneg %p413
        %p646 = pneg %p442
        %p647 = pneg %p439
        %s648 = sand.u32 %s429, 1
        %s649 = scalar_lea.sflag [#allocation3], %s648
        %s650 = sand.u32 %s429, 1
        %s651 = smul.addr %s650, 16
        %s652 = scalar_lea.vmem [#allocation2], %s651
        %s653 = smul.u32 2, %s33
        %p654 = scmp.lt.s32.totalorder %s653, 3
        %s655 = scalar_select %p654, %s653, 3
        %s656 = smul.addr %s655, 8
        %s657 = scalar_lea.vmem %s0, %s656
        %s658 = smul.u32 2, %s33
        %p659 = scmp.lt.s32.totalorder %s34, 1
        %s660 = scalar_select %p659, %s34, 1
        %s661 = scalar_lea.vmem %s1, %s660
        %p662 = scmp.lt.s32.totalorder %s34, 1
        %s663 = scalar_select %p662, %s34, 1
        %s664 = scalar_lea.vmem %s2, %s663
        %p665 = scmp.lt.s32.totalorder %s34, 1
        %s666 = scalar_select %p665, %s34, 1
        %s667 = smul.addr %s666, 16
        %s668 = smul.addr %s667, 4
        %s669 = scalar_lea.vmem %s3, %s668
        %p670 = scmp.lt.s32.totalorder %s34, 1
        %s671 = scalar_select %p670, %s34, 1
        %s672 = smul.addr %s671, 2
        %s673 = scalar_lea.vmem %s4, %s672
        %p674 = scmp.lt.s32.totalorder %s34, 1
        %s675 = scalar_select %p674, %s34, 1
        %s676 = smul.addr %s675, 8
        %s677 = smul.addr %s676, 4
        %s678 = scalar_lea.vmem %s5, %s677
        %p679 = scmp.lt.s32.totalorder %s34, 1
        %s680 = scalar_select %p679, %s34, 1
        %s681 = scalar_lea.vmem %s6, %s680
        %p682 = scmp.lt.s32.totalorder %s34, 1
        %s683 = scalar_select %p682, %s34, 1
        %s684 = scalar_lea.vmem %s7, %s683
        %p685 = scmp.lt.s32.totalorder %s34, 1
        %s686 = scalar_select %p685, %s34, 1
        %s687 = scalar_lea.vmem %s8, %s686
        %p688 = scmp.lt.s32.totalorder %s34, 1
        %s689 = scalar_select %p688, %s34, 1
        %s690 = smul.addr %s689, 16
        %s691 = smul.addr %s690, 4
        %s692 = scalar_lea.vmem %s9, %s691
        %p693 = scmp.lt.s32.totalorder %s34, 1
        %s694 = scalar_select %p693, %s34, 1
        %s695 = smul.addr %s694, 2
        %s696 = scalar_lea.vmem %s10, %s695
        %p697 = scmp.lt.s32.totalorder %s34, 1
        %s698 = scalar_select %p697, %s34, 1
        %s699 = smul.addr %s698, 32
        %s700 = smul.addr %s699, 4
        %s701 = scalar_lea.vmem %s11, %s700
        %p702 = scmp.lt.s32.totalorder %s34, 1
        %s703 = scalar_select %p702, %s34, 1
        %s704 = scalar_lea.vmem %s12, %s703
        %s705 = smul.u32 2, %s33
        %p708 = scmp.eq.s32.totalorder %s34, 0
        // Predicated region
        $region81: #{clip_forward.1} parent=79 // pred_check
          %p709 = pneg %p708
        $region82: #{clip_forward.1} parent=79 // pred_check_branch
          %711 = sbr.rel (%p709) target = $region84
        $region83: #{clip_forward.1} parent=79 // pred_region
          %v712 = vld [vmem:[%s657] sm:$0xff]
          %v713 = vld [vmem:[%s657 + $0x8] sm:$0xff]
          %vm714 = vcmask 523264
          %715 = vst.msk [vmem:[%s652] sm:$0xff] %vm714, %v712
          %716 = vst.msk [vmem:[%s652 + $0x8] sm:$0xff] %vm714, %v713
        $region84: #{clip_forward.1} parent=79 // pred_fallthru
          _
        %v717 = vld [vmem:[%s652] sm:$0xff]
        %v718 = vld [vmem:[%s652 + $0x8] sm:$0xff]
        %v719 = vld [vmem:[%s661] sm:$0x1]
        %v720 = vld [vmem:[%s664] sm:$0x1]
        %vm721 = vcmask 523264
        %v722 = vsel %vm721, %v717, 0.0
        %723 = vadd.xlane.f32.xlu0 %v722
        %v724 = vpop.xlane.xlu0 %723
        %v725 = vsel %vm721, %v718, 0.0
        %726 = vadd.xlane.f32.xlu0 %v725
        %v727 = vpop.xlane.xlu0 %726
        %v728 = vrcp.pop 64.0
        %v729 = vmul.f32 64.0, %v728
        %v730 = vsub.f32 1.0, %v729
        %v731 = vmul.f32 %v728, %v730
        %v732 = vadd.f32 %v728, %v731
        %vm733 = vweird.f32 %v728
        %v734 = vsel %vm733, %v728, %v732
        %v735 = vmul.f32 %v724, %v734
        %v736 = vmul.f32 %v727, %v734
        %v737 = vmul.f32 %v717, %v717
        %v738 = vmul.f32 %v718, %v718
        %v739 = vsel %vm721, %v737, 0.0
        %740 = vadd.xlane.f32.xlu0 %v739
        %v741 = vpop.xlane.xlu0 %740
        %v742 = vsel %vm721, %v738, 0.0
        %743 = vadd.xlane.f32.xlu0 %v742
        %v744 = vpop.xlane.xlu0 %743
        %v745 = vmul.f32 %v741, %v734
        %v746 = vmul.f32 %v744, %v734
        %v747 = vmul.f32 %v735, %v735
        %v748 = vmul.f32 %v736, %v736
        %v749 = vsub.f32 %v745, %v747
        %v750 = vsub.f32 %v746, %v748
        %v751 = vsub.f32 %v717, %v735
        %v752 = vsub.f32 %v718, %v736
        %v753 = vadd.f32 %v749, 1e-05
        %v754 = vadd.f32 %v750, 1e-05
        %v755 = vrsqrt.pop %v753
        %v756 = vmul.f32 %v755, %v753
        %v757 = vmul.f32 %v756, %v755
        %v758 = vmul.f32 0.5, %v757
        %v759 = vsub.f32 1.5, %v758
        %v760 = vmul.f32 %v755, %v759
        %vm761 = vweird.f32 %v753
        %vm762 = vweird.f32 %v755
        %vm763 = vmor %vm761, %vm762
        %v764 = vsel %vm763, %v755, %v760
        %v765 = vrsqrt.pop %v754
        %v766 = vmul.f32 %v765, %v754
        %v767 = vmul.f32 %v766, %v765
        %v768 = vmul.f32 0.5, %v767
        %v769 = vsub.f32 1.5, %v768
        %v770 = vmul.f32 %v765, %v769
        %vm771 = vweird.f32 %v754
        %vm772 = vweird.f32 %v765
        %vm773 = vmor %vm771, %vm772
        %v774 = vsel %vm773, %v765, %v770
        %v775 = vmul.f32 %v751, %v764
        %v776 = vmul.f32 %v752, %v774
        %v778 = vperm.slane %v719, 0
        %v780 = vmul.f32 %v775, %v778
        %v781 = vmul.f32 %v776, %v778
        %v783 = vperm.slane %v720, 0
        %v785 = vadd.f32 %v780, %v783
        %v786 = vadd.f32 %v781, %v783
        %v787 = vpack.c.bf16 %v786, %v785
        %v788 = vld [vmem:[%s669] sm:$0xff]
        %v789 = vld [vmem:[%s669 + $0x8] sm:$0xff]
        %v790 = vld [vmem:[%s669 + $0x10] sm:$0xff]
        %v791 = vld [vmem:[%s669 + $0x18] sm:$0xff]
        %v792 = vld [vmem:[%s669 + $0x20] sm:$0xff]
        %v793 = vld [vmem:[%s669 + $0x28] sm:$0xff]
        %v794 = vld [vmem:[%s669 + $0x30] sm:$0xff]
        %v795 = vld [vmem:[%s669 + $0x38] sm:$0xff]
        %v796 = vld [vmem:[%s673] sm:$0x3]
        %v798 = vperm.slane %v796, 0
        %v799 = vperm.slane %v796, 1
        %v810 = vunpack.c.l.b16 %v788
        %v811 = vunpack.c.h.b16 %v788
        %v812 = vunpack.c.l.b16 %v789
        %v813 = vunpack.c.h.b16 %v789
        %v814 = vunpack.c.l.b16 %v790
        %v815 = vunpack.c.h.b16 %v790
        %v816 = vunpack.c.l.b16 %v791
        %v817 = vunpack.c.h.b16 %v791
        %v818 = vunpack.c.l.b16 %v792
        %v819 = vunpack.c.h.b16 %v792
        %v820 = vunpack.c.l.b16 %v793
        %v821 = vunpack.c.h.b16 %v793
        %v822 = vunpack.c.l.b16 %v794
        %v823 = vunpack.c.h.b16 %v794
        %v824 = vunpack.c.l.b16 %v795
        %v825 = vunpack.c.h.b16 %v795
        %v826 = vpack.c.b16 %v812, %v810
        %v827 = vpack.c.b16 %v813, %v811
        %v828 = vpack.c.b16 %v816, %v814
        %v829 = vpack.c.b16 %v817, %v815
        %v830 = vpack.c.b16 %v820, %v818
        %v831 = vpack.c.b16 %v821, %v819
        %v832 = vpack.c.b16 %v824, %v822
        %v833 = vpack.c.b16 %v825, %v823
        %v843 = vsel %vm721, %v787, 0
        %845 = vmatpush.bf16.msra.mxu0 0
        %846 = vmatpush.bf16.msra.mxu0 0
        %847 = vmatpush.bf16.msra.mxu0 0
        %848 = vmatpush.bf16.msra.mxu0 0
        %849 = vmatpush.bf16.msra.mxu0 %v832
        %850 = vmatpush.bf16.msra.mxu0 %v830
        %851 = vmatpush.bf16.msra.mxu0 %v828
        %852 = vmatpush.bf16.msra.mxu0 %v826
        %853 = vmatmul.bf16.gmra.mxu0 %v843
        %v854 = vpop.f32.mrf.mxu0
        %v855 = vadd.f32 %v798, %v854
        %v856 = vpop.f32.mrf.mxu0
        %v857 = vadd.f32 %v798, %v856
        %858 = vdwg.mxu0
        %859 = vmatpush.bf16.msra.mxu0 0
        %860 = vmatpush.bf16.msra.mxu0 0
        %861 = vmatpush.bf16.msra.mxu0 0
        %862 = vmatpush.bf16.msra.mxu0 0
        %863 = vmatpush.bf16.msra.mxu0 %v833
        %864 = vmatpush.bf16.msra.mxu0 %v831
        %865 = vmatpush.bf16.msra.mxu0 %v829
        %866 = vmatpush.bf16.msra.mxu0 %v827
        %867 = vmatmul.bf16.gmra.mxu0 %v843
        %v868 = vpop.f32.mrf.mxu0
        %v869 = vadd.f32 %v799, %v868
        %v870 = vpop.f32.mrf.mxu0
        %v871 = vadd.f32 %v799, %v870
        %872 = vdwg.mxu0
        %v873 = vlaneseq
        %v874 = vshrl.u32 %v873, 7
        %v875 = vlaneseq
        %v876 = vand.u32 %v875, 127
        %vm877 = vcmp.gt.s32.totalorder %v876, %v874
        %v878 = vmul.f32 %v855, 0.25
        %880 = vrot.lane.b32.xlu0 %v878, 112
        %v881 = vpop.permute.xlu0 %880
        %883 = vrot.lane.b32.xlu0 %v878, 96
        %v884 = vpop.permute.xlu0 %883
        %886 = vrot.lane.b32.xlu0 %v878, 80
        %v887 = vpop.permute.xlu0 %886
        %v889 = vrot.slane %v884, 4
        %vm890 = vcmask 1047556
        %v891 = vsel %vm890, %v889, %v878
        %v892 = vrot.slane %v878, 4
        %v893 = vsel %vm890, %v884, %v892
        %v895 = vunpack.c.l.s4 1983009808
        %v896 = vunpack.c.0.s8 %v895
        %v897 = vperm.slane %v891, %v896
        %v899 = vunpack.c.l.s4 1983009808
        %v900 = vunpack.c.0.s8 %v899
        %v901 = vperm.slane %v893, %v900
        %v902 = vrot.slane %v887, 4
        %v903 = vsel %vm890, %v902, %v881
        %v904 = vrot.slane %v881, 4
        %v905 = vsel %vm890, %v887, %v904
        %v907 = vunpack.c.l.s4 1983009808
        %v908 = vunpack.c.0.s8 %v907
        %v909 = vperm.slane %v903, %v908
        %v911 = vunpack.c.l.s4 1983009808
        %v912 = vunpack.c.0.s8 %v911
        %v913 = vperm.slane %v905, %v912
        %v914 = vrot.slane %v909, 4
        %v915 = vsel %vm890, %v914, %v897
        %v916 = vrot.slane %v897, 4
        %v917 = vsel %vm890, %v909, %v916
        %v919 = vunpack.c.l.s4 1934713408
        %v920 = vunpack.c.0.s8 %v919
        %v921 = vperm.slane %v915, %v920
        %v923 = vunpack.c.l.s4 1934713408
        %v924 = vunpack.c.0.s8 %v923
        %v925 = vperm.slane %v917, %v924
        %v926 = vrot.slane %v913, 4
        %v927 = vsel %vm890, %v926, %v901
        %v928 = vrot.slane %v901, 4
        %v929 = vsel %vm890, %v913, %v928
        %v931 = vunpack.c.l.s4 1934713408
        %v932 = vunpack.c.0.s8 %v931
        %v933 = vperm.slane %v927, %v932
        %v935 = vunpack.c.l.s4 1934713408
        %v936 = vunpack.c.0.s8 %v935
        %v937 = vperm.slane %v929, %v936
        %v938 = vrot.slane %v921, 4
        %v939 = vsel %vm890, 0.0, %v938
        %v940 = vrot.slane %v925, 4
        %v941 = vsel %vm890, 0.0, %v940
        %v942 = vrot.slane %v933, 4
        %v943 = vsel %vm890, 0.0, %v942
        %v944 = vrot.slane %v937, 4
        %v945 = vsel %vm890, 0.0, %v944
        %947 = vrot.lane.b32.xlu0 %v855, 112
        %v948 = vpop.permute.xlu0 %947
        %949 = vrot.lane.b32.xlu0 %v855, 96
        %v950 = vpop.permute.xlu0 %949
        %951 = vrot.lane.b32.xlu0 %v855, 80
        %v952 = vpop.permute.xlu0 %951
        %953 = vrot.lane.b32.xlu0 %v855, 64
        %v954 = vpop.permute.xlu0 %953
        %955 = vrot.lane.b32.xlu0 %v948, 64
        %v956 = vpop.permute.xlu0 %955
        %957 = vrot.lane.b32.xlu0 %v950, 64
        %v958 = vpop.permute.xlu0 %957
        %959 = vrot.lane.b32.xlu0 %v952, 64
        %v960 = vpop.permute.xlu0 %959
        %v965 = vrot.slane %v958, 4
        %v966 = vsel %vm890, %v965, %v954
        %v967 = vrot.slane %v954, 4
        %v968 = vsel %vm890, %v958, %v967
        %v970 = vunpack.c.l.s4 1983009808
        %v971 = vunpack.c.0.s8 %v970
        %v972 = vperm.slane %v966, %v971
        %v974 = vunpack.c.l.s4 1983009808
        %v975 = vunpack.c.0.s8 %v974
        %v976 = vperm.slane %v968, %v975
        %v977 = vrot.slane %v960, 4
        %v978 = vsel %vm890, %v977, %v956
        %v979 = vrot.slane %v956, 4
        %v980 = vsel %vm890, %v960, %v979
        %v982 = vunpack.c.l.s4 1983009808
        %v983 = vunpack.c.0.s8 %v982
        %v984 = vperm.slane %v978, %v983
        %v986 = vunpack.c.l.s4 1983009808
        %v987 = vunpack.c.0.s8 %v986
        %v988 = vperm.slane %v980, %v987
        %v989 = vrot.slane %v984, 4
        %v990 = vsel %vm890, %v989, %v972
        %v991 = vrot.slane %v972, 4
        %v992 = vsel %vm890, %v984, %v991
        %v994 = vunpack.c.l.s4 1934713408
        %v995 = vunpack.c.0.s8 %v994
        %v996 = vperm.slane %v990, %v995
        %v998 = vunpack.c.l.s4 1934713408
        %v999 = vunpack.c.0.s8 %v998
        %v1000 = vperm.slane %v992, %v999
        %v1001 = vrot.slane %v988, 4
        %v1002 = vsel %vm890, %v1001, %v976
        %v1003 = vrot.slane %v976, 4
        %v1004 = vsel %vm890, %v988, %v1003
        %v1006 = vunpack.c.l.s4 1934713408
        %v1007 = vunpack.c.0.s8 %v1006
        %v1008 = vperm.slane %v1002, %v1007
        %v1010 = vunpack.c.l.s4 1934713408
        %v1011 = vunpack.c.0.s8 %v1010
        %v1012 = vperm.slane %v1004, %v1011
        %v1013 = vrot.slane %v996, 4
        %v1014 = vsel %vm890, 0.0, %v1013
        %v1015 = vrot.slane %v1000, 4
        %v1016 = vsel %vm890, 0.0, %v1015
        %v1017 = vrot.slane %v1008, 4
        %v1018 = vsel %vm890, 0.0, %v1017
        %v1019 = vrot.slane %v1012, 4
        %v1020 = vsel %vm890, 0.0, %v1019
        %1022 = vrot.lane.b32.xlu0 %v869, 112
        %v1023 = vpop.permute.xlu0 %1022
        %1025 = vrot.lane.b32.xlu0 %v869, 96
        %v1026 = vpop.permute.xlu0 %1025
        %1028 = vrot.lane.b32.xlu0 %v869, 80
        %v1029 = vpop.permute.xlu0 %1028
        %v1031 = vrot.slane %v1026, 4
        %v1032 = vsel %vm890, %v1031, %v869
        %v1033 = vrot.slane %v869, 4
        %v1034 = vsel %vm890, %v1026, %v1033
        %v1036 = vunpack.c.l.s4 1983009808
        %v1037 = vunpack.c.0.s8 %v1036
        %v1038 = vperm.slane %v1032, %v1037
        %v1040 = vunpack.c.l.s4 1983009808
        %v1041 = vunpack.c.0.s8 %v1040
        %v1042 = vperm.slane %v1034, %v1041
        %v1043 = vrot.slane %v1029, 4
        %v1044 = vsel %vm890, %v1043, %v1023
        %v1045 = vrot.slane %v1023, 4
        %v1046 = vsel %vm890, %v1029, %v1045
        %v1048 = vunpack.c.l.s4 1983009808
        %v1049 = vunpack.c.0.s8 %v1048
        %v1050 = vperm.slane %v1044, %v1049
        %v1052 = vunpack.c.l.s4 1983009808
        %v1053 = vunpack.c.0.s8 %v1052
        %v1054 = vperm.slane %v1046, %v1053
        %v1055 = vrot.slane %v1050, 4
        %v1056 = vsel %vm890, %v1055, %v1038
        %v1057 = vrot.slane %v1038, 4
        %v1058 = vsel %vm890, %v1050, %v1057
        %v1060 = vunpack.c.l.s4 1934713408
        %v1061 = vunpack.c.0.s8 %v1060
        %v1062 = vperm.slane %v1056, %v1061
        %v1064 = vunpack.c.l.s4 1934713408
        %v1065 = vunpack.c.0.s8 %v1064
        %v1066 = vperm.slane %v1058, %v1065
        %v1067 = vrot.slane %v1054, 4
        %v1068 = vsel %vm890, %v1067, %v1042
        %v1069 = vrot.slane %v1042, 4
        %v1070 = vsel %vm890, %v1054, %v1069
        %v1072 = vunpack.c.l.s4 1934713408
        %v1073 = vunpack.c.0.s8 %v1072
        %v1074 = vperm.slane %v1068, %v1073
        %v1076 = vunpack.c.l.s4 1934713408
        %v1077 = vunpack.c.0.s8 %v1076
        %v1078 = vperm.slane %v1070, %v1077
        %v1079 = vrot.slane %v1062, 4
        %v1080 = vsel %vm890, 0.0, %v1079
        %v1081 = vrot.slane %v1066, 4
        %v1082 = vsel %vm890, 0.0, %v1081
        %v1083 = vrot.slane %v1074, 4
        %v1084 = vsel %vm890, 0.0, %v1083
        %v1085 = vrot.slane %v1078, 4
        %v1086 = vsel %vm890, 0.0, %v1085
        %v1087 = vsel %vm890, %v940, %v921
        %v1089 = vunpack.c.l.s4 1983009808
        %v1090 = vunpack.c.0.s8 %v1089
        %v1091 = vperm.slane %v1087, %v1090
        %v1092 = vrot.slane %v941, 4
        %v1093 = vsel %vm890, %v1092, %v939
        %v1095 = vunpack.c.l.s4 1983009808
        %v1096 = vunpack.c.0.s8 %v1095
        %v1097 = vperm.slane %v1093, %v1096
        %v1098 = vsel %vm890, %v944, %v933
        %v1100 = vunpack.c.l.s4 1983009808
        %v1101 = vunpack.c.0.s8 %v1100
        %v1102 = vperm.slane %v1098, %v1101
        %v1103 = vrot.slane %v945, 4
        %v1104 = vsel %vm890, %v1103, %v943
        %v1106 = vunpack.c.l.s4 1983009808
        %v1107 = vunpack.c.0.s8 %v1106
        %v1108 = vperm.slane %v1104, %v1107
        %v1109 = vrot.slane %v1097, 4
        %v1110 = vsel %vm890, %v1109, %v1091
        %v1111 = vrot.slane %v1091, 4
        %v1112 = vsel %vm890, %v1097, %v1111
        %v1114 = vunpack.c.l.s4 1934713408
        %v1115 = vunpack.c.0.s8 %v1114
        %v1116 = vperm.slane %v1110, %v1115
        %v1118 = vunpack.c.l.s4 1934713408
        %v1119 = vunpack.c.0.s8 %v1118
        %v1120 = vperm.slane %v1112, %v1119
        %v1121 = vrot.slane %v1108, 4
        %v1122 = vsel %vm890, %v1121, %v1102
        %v1123 = vrot.slane %v1102, 4
        %v1124 = vsel %vm890, %v1108, %v1123
        %v1126 = vunpack.c.l.s4 1934713408
        %v1127 = vunpack.c.0.s8 %v1126
        %v1128 = vperm.slane %v1122, %v1127
        %v1130 = vunpack.c.l.s4 1934713408
        %v1131 = vunpack.c.0.s8 %v1130
        %v1132 = vperm.slane %v1124, %v1131
        %v1133 = vrot.slane %v1128, 4
        %v1134 = vsel %vm890, %v1133, %v1116
        %v1135 = vrot.slane %v1116, 4
        %v1136 = vsel %vm890, %v1128, %v1135
        %v1137 = vrot.slane %v1132, 4
        %v1138 = vsel %vm890, %v1137, %v1120
        %v1139 = vrot.slane %v1120, 4
        %v1140 = vsel %vm890, %v1132, %v1139
        %v1141 = vpack.c.bf16 %v1134, %v1134
        %v1142 = vpack.c.bf16 %v1136, %v1136
        %v1143 = vpack.c.bf16 %v1138, %v1138
        %v1144 = vpack.c.bf16 %v1140, %v1140
        %v1145 = vsel %vm890, %v1015, %v996
        %v1147 = vunpack.c.l.s4 1983009808
        %v1148 = vunpack.c.0.s8 %v1147
        %v1149 = vperm.slane %v1145, %v1148
        %v1150 = vrot.slane %v1016, 4
        %v1151 = vsel %vm890, %v1150, %v1014
        %v1153 = vunpack.c.l.s4 1983009808
        %v1154 = vunpack.c.0.s8 %v1153
        %v1155 = vperm.slane %v1151, %v1154
        %v1156 = vsel %vm890, %v1019, %v1008
        %v1158 = vunpack.c.l.s4 1983009808
        %v1159 = vunpack.c.0.s8 %v1158
        %v1160 = vperm.slane %v1156, %v1159
        %v1161 = vrot.slane %v1020, 4
        %v1162 = vsel %vm890, %v1161, %v1018
        %v1164 = vunpack.c.l.s4 1983009808
        %v1165 = vunpack.c.0.s8 %v1164
        %v1166 = vperm.slane %v1162, %v1165
        %v1167 = vrot.slane %v1155, 4
        %v1168 = vsel %vm890, %v1167, %v1149
        %v1169 = vrot.slane %v1149, 4
        %v1170 = vsel %vm890, %v1155, %v1169
        %v1172 = vunpack.c.l.s4 1934713408
        %v1173 = vunpack.c.0.s8 %v1172
        %v1174 = vperm.slane %v1168, %v1173
        %v1176 = vunpack.c.l.s4 1934713408
        %v1177 = vunpack.c.0.s8 %v1176
        %v1178 = vperm.slane %v1170, %v1177
        %v1179 = vrot.slane %v1166, 4
        %v1180 = vsel %vm890, %v1179, %v1160
        %v1181 = vrot.slane %v1160, 4
        %v1182 = vsel %vm890, %v1166, %v1181
        %v1184 = vunpack.c.l.s4 1934713408
        %v1185 = vunpack.c.0.s8 %v1184
        %v1186 = vperm.slane %v1180, %v1185
        %v1188 = vunpack.c.l.s4 1934713408
        %v1189 = vunpack.c.0.s8 %v1188
        %v1190 = vperm.slane %v1182, %v1189
        %v1191 = vrot.slane %v1186, 4
        %v1192 = vsel %vm890, %v1191, %v1174
        %v1193 = vrot.slane %v1174, 4
        %v1194 = vsel %vm890, %v1186, %v1193
        %v1195 = vrot.slane %v1190, 4
        %v1196 = vsel %vm890, %v1195, %v1178
        %v1197 = vrot.slane %v1178, 4
        %v1198 = vsel %vm890, %v1190, %v1197
        %v1199 = vpack.c.bf16 %v1192, %v1192
        %v1200 = vpack.c.bf16 %v1194, %v1194
        %v1201 = vpack.c.bf16 %v1196, %v1196
        %v1202 = vpack.c.bf16 %v1198, %v1198
        %v1203 = vsel %vm890, %v1081, %v1062
        %v1205 = vunpack.c.l.s4 1983009808
        %v1206 = vunpack.c.0.s8 %v1205
        %v1207 = vperm.slane %v1203, %v1206
        %v1208 = vrot.slane %v1082, 4
        %v1209 = vsel %vm890, %v1208, %v1080
        %v1211 = vunpack.c.l.s4 1983009808
        %v1212 = vunpack.c.0.s8 %v1211
        %v1213 = vperm.slane %v1209, %v1212
        %v1214 = vsel %vm890, %v1085, %v1074
        %v1216 = vunpack.c.l.s4 1983009808
        %v1217 = vunpack.c.0.s8 %v1216
        %v1218 = vperm.slane %v1214, %v1217
        %v1219 = vrot.slane %v1086, 4
        %v1220 = vsel %vm890, %v1219, %v1084
        %v1222 = vunpack.c.l.s4 1983009808
        %v1223 = vunpack.c.0.s8 %v1222
        %v1224 = vperm.slane %v1220, %v1223
        %v1225 = vrot.slane %v1213, 4
        %v1226 = vsel %vm890, %v1225, %v1207
        %v1227 = vrot.slane %v1207, 4
        %v1228 = vsel %vm890, %v1213, %v1227
        %v1230 = vunpack.c.l.s4 1934713408
        %v1231 = vunpack.c.0.s8 %v1230
        %v1232 = vperm.slane %v1226, %v1231
        %v1234 = vunpack.c.l.s4 1934713408
        %v1235 = vunpack.c.0.s8 %v1234
        %v1236 = vperm.slane %v1228, %v1235
        %v1237 = vrot.slane %v1224, 4
        %v1238 = vsel %vm890, %v1237, %v1218
        %v1239 = vrot.slane %v1218, 4
        %v1240 = vsel %vm890, %v1224, %v1239
        %v1242 = vunpack.c.l.s4 1934713408
        %v1243 = vunpack.c.0.s8 %v1242
        %v1244 = vperm.slane %v1238, %v1243
        %v1246 = vunpack.c.l.s4 1934713408
        %v1247 = vunpack.c.0.s8 %v1246
        %v1248 = vperm.slane %v1240, %v1247
        %v1249 = vrot.slane %v1244, 4
        %v1250 = vsel %vm890, %v1249, %v1232
        %v1251 = vrot.slane %v1232, 4
        %v1252 = vsel %vm890, %v1244, %v1251
        %v1253 = vrot.slane %v1248, 4
        %v1254 = vsel %vm890, %v1253, %v1236
        %v1255 = vrot.slane %v1236, 4
        %v1256 = vsel %vm890, %v1248, %v1255
        %v1257 = vpack.c.bf16 %v1250, %v1250
        %v1258 = vpack.c.bf16 %v1252, %v1252
        %v1259 = vpack.c.bf16 %v1254, %v1254
        %v1260 = vpack.c.bf16 %v1256, %v1256
        %vm1261 = vcmask 130048
        %v1263 = vsel %vm1261, %v1141, 0
        %v1266 = vsel %vm1261, %v1199, 0
        %1268 = vmatpush.bf16.xpose.msra.mxu0 0
        %1269 = vmatpush.bf16.xpose.msra.mxu0 0
        %1270 = vmatpush.bf16.xpose.msra.mxu0 0
        %1271 = vmatpush.bf16.xpose.msra.mxu0 0
        %1272 = vmatpush.bf16.xpose.msra.mxu0 0
        %1273 = vmatpush.bf16.xpose.msra.mxu0 0
        %1274 = vmatpush.bf16.xpose.msra.mxu0 0
        %1275 = vmatpush.bf16.xpose.msra.mxu0 %v1266
        %1276 = vmatmul.bf16.gmra.mxu0 %v1263
        %v1277 = vpop.f32.mrf.mxu0
        %v1278 = vadd.f32 0.0, %v1277
        %v1279 = vpop.f32.mrf.mxu0
        %1280 = vdwg.mxu0
        %v1282 = vsel %vm1261, %v1142, 0
        %v1285 = vsel %vm1261, %v1200, 0
        %1287 = vmatpush.bf16.xpose.msra.mxu0 0
        %1288 = vmatpush.bf16.xpose.msra.mxu0 0
        %1289 = vmatpush.bf16.xpose.msra.mxu0 0
        %1290 = vmatpush.bf16.xpose.msra.mxu0 0
        %1291 = vmatpush.bf16.xpose.msra.mxu0 0
        %1292 = vmatpush.bf16.xpose.msra.mxu0 0
        %1293 = vmatpush.bf16.xpose.msra.mxu0 0
        %1294 = vmatpush.bf16.xpose.msra.mxu0 %v1285
        %1295 = vmatmul.bf16.gmra.mxu0 %v1282
        %v1296 = vpop.f32.mrf.mxu0
        %v1297 = vadd.f32 0.0, %v1296
        %v1298 = vpop.f32.mrf.mxu0
        %1299 = vdwg.mxu0
        %v1301 = vsel %vm1261, %v1143, 0
        %v1304 = vsel %vm1261, %v1201, 0
        %1306 = vmatpush.bf16.xpose.msra.mxu0 0
        %1307 = vmatpush.bf16.xpose.msra.mxu0 0
        %1308 = vmatpush.bf16.xpose.msra.mxu0 0
        %1309 = vmatpush.bf16.xpose.msra.mxu0 0
        %1310 = vmatpush.bf16.xpose.msra.mxu0 0
        %1311 = vmatpush.bf16.xpose.msra.mxu0 0
        %1312 = vmatpush.bf16.xpose.msra.mxu0 0
        %1313 = vmatpush.bf16.xpose.msra.mxu0 %v1304
        %1314 = vmatmul.bf16.gmra.mxu0 %v1301
        %v1315 = vpop.f32.mrf.mxu0
        %v1316 = vadd.f32 0.0, %v1315
        %v1317 = vpop.f32.mrf.mxu0
        %1318 = vdwg.mxu0
        %v1320 = vsel %vm1261, %v1144, 0
        %v1323 = vsel %vm1261, %v1202, 0
        %1325 = vmatpush.bf16.xpose.msra.mxu0 0
        %1326 = vmatpush.bf16.xpose.msra.mxu0 0
        %1327 = vmatpush.bf16.xpose.msra.mxu0 0
        %1328 = vmatpush.bf16.xpose.msra.mxu0 0
        %1329 = vmatpush.bf16.xpose.msra.mxu0 0
        %1330 = vmatpush.bf16.xpose.msra.mxu0 0
        %1331 = vmatpush.bf16.xpose.msra.mxu0 0
        %1332 = vmatpush.bf16.xpose.msra.mxu0 %v1323
        %1333 = vmatmul.bf16.gmra.mxu0 %v1320
        %v1334 = vpop.f32.mrf.mxu0
        %v1335 = vadd.f32 0.0, %v1334
        %v1336 = vpop.f32.mrf.mxu0
        %1337 = vdwg.mxu0
        %v1338 = vsel %vm877, 1, 0
        %vm1339 = vcmp.eq.s32.totalorder %v1338, 1
        %v1340 = vsel %vm1339, -1e+30, %v1278
        %v1341 = vsel %vm1339, -1e+30, %v1297
        %v1342 = vsel %vm1339, -1e+30, %v1316
        %v1343 = vsel %vm1339, -1e+30, %v1335
        %vm1344 = vcmask 64512
        %v1345 = vsel %vm1344, %v1340, -inf
        %1346 = vmax.xlane.f32.xlu0 %v1345
        %v1347 = vpop.xlane.xlu0 %1346
        %v1348 = vsel %vm1344, %v1341, -inf
        %1349 = vmax.xlane.f32.xlu0 %v1348
        %v1350 = vpop.xlane.xlu0 %1349
        %v1351 = vsel %vm1344, %v1342, -inf
        %1352 = vmax.xlane.f32.xlu0 %v1351
        %v1353 = vpop.xlane.xlu0 %1352
        %v1354 = vsel %vm1344, %v1343, -inf
        %1355 = vmax.xlane.f32.xlu0 %v1354
        %v1356 = vpop.xlane.xlu0 %1355
        %v1357 = vsub.f32 %v1340, %v1347
        %v1358 = vsub.f32 %v1341, %v1350
        %v1359 = vsub.f32 %v1342, %v1353
        %v1360 = vsub.f32 %v1343, %v1356
        %v1361 = vmul.f32 %v1357, 1.442695
        %v1362 = vpow.pop %v1361
        %v1363 = vmul.f32 %v1358, 1.442695
        %v1364 = vpow.pop %v1363
        %v1365 = vmul.f32 %v1359, 1.442695
        %v1366 = vpow.pop %v1365
        %v1367 = vmul.f32 %v1360, 1.442695
        %v1368 = vpow.pop %v1367
        %v1369 = vsel %vm1344, %v1362, 0.0
        %1370 = vadd.xlane.f32.xlu0 %v1369
        %v1371 = vpop.xlane.xlu0 %1370
        %v1372 = vsel %vm1344, %v1364, 0.0
        %1373 = vadd.xlane.f32.xlu0 %v1372
        %v1374 = vpop.xlane.xlu0 %1373
        %v1375 = vsel %vm1344, %v1366, 0.0
        %1376 = vadd.xlane.f32.xlu0 %v1375
        %v1377 = vpop.xlane.xlu0 %1376
        %v1378 = vsel %vm1344, %v1368, 0.0
        %1379 = vadd.xlane.f32.xlu0 %v1378
        %v1380 = vpop.xlane.xlu0 %1379
        %v1381 = vrcp.pop %v1371
        %v1382 = vrcp.pop %v1374
        %v1383 = vrcp.pop %v1377
        %v1384 = vrcp.pop %v1380
        %v1385 = vmul.f32 %v1362, %v1381
        %v1386 = vmul.f32 %v1364, %v1382
        %v1387 = vmul.f32 %v1366, %v1383
        %v1388 = vmul.f32 %v1368, %v1384
        %v1389 = vpack.c.bf16 %v1385, %v1385
        %v1390 = vpack.c.bf16 %v1386, %v1386
        %v1391 = vpack.c.bf16 %v1387, %v1387
        %v1392 = vpack.c.bf16 %v1388, %v1388
        %v1394 = vsel %vm1344, %v1389, 0
        %vm1396 = vcmask 1043456
        %v1398 = vsel %vm1396, %v1257, 0
        %1400 = vmatpush.bf16.msra.mxu0 0
        %1401 = vmatpush.bf16.msra.mxu0 0
        %1402 = vmatpush.bf16.msra.mxu0 0
        %1403 = vmatpush.bf16.msra.mxu0 0
        %1404 = vmatpush.bf16.msra.mxu0 0
        %1405 = vmatpush.bf16.msra.mxu0 0
        %1406 = vmatpush.bf16.msra.mxu0 0
        %1407 = vmatpush.bf16.msra.mxu0 %v1398
        %1408 = vmatmul.bf16.gmra.mxu0 %v1394
        %v1409 = vpop.f32.mrf.mxu0
        %v1410 = vadd.f32 0.0, %v1409
        %v1411 = vpop.f32.mrf.mxu0
        %1412 = vdwg.mxu0
        %v1414 = vsel %vm1344, %v1390, 0
        %v1417 = vsel %vm1396, %v1258, 0
        %1419 = vmatpush.bf16.msra.mxu0 0
        %1420 = vmatpush.bf16.msra.mxu0 0
        %1421 = vmatpush.bf16.msra.mxu0 0
        %1422 = vmatpush.bf16.msra.mxu0 0
        %1423 = vmatpush.bf16.msra.mxu0 0
        %1424 = vmatpush.bf16.msra.mxu0 0
        %1425 = vmatpush.bf16.msra.mxu0 0
        %1426 = vmatpush.bf16.msra.mxu0 %v1417
        %1427 = vmatmul.bf16.gmra.mxu0 %v1414
        %v1428 = vpop.f32.mrf.mxu0
        %v1429 = vadd.f32 0.0, %v1428
        %v1430 = vpop.f32.mrf.mxu0
        %1431 = vdwg.mxu0
        %v1433 = vsel %vm1344, %v1391, 0
        %v1436 = vsel %vm1396, %v1259, 0
        %1438 = vmatpush.bf16.msra.mxu0 0
        %1439 = vmatpush.bf16.msra.mxu0 0
        %1440 = vmatpush.bf16.msra.mxu0 0
        %1441 = vmatpush.bf16.msra.mxu0 0
        %1442 = vmatpush.bf16.msra.mxu0 0
        %1443 = vmatpush.bf16.msra.mxu0 0
        %1444 = vmatpush.bf16.msra.mxu0 0
        %1445 = vmatpush.bf16.msra.mxu0 %v1436
        %1446 = vmatmul.bf16.gmra.mxu0 %v1433
        %v1447 = vpop.f32.mrf.mxu0
        %v1448 = vadd.f32 0.0, %v1447
        %v1449 = vpop.f32.mrf.mxu0
        %1450 = vdwg.mxu0
        %v1452 = vsel %vm1344, %v1392, 0
        %v1455 = vsel %vm1396, %v1260, 0
        %1457 = vmatpush.bf16.msra.mxu0 0
        %1458 = vmatpush.bf16.msra.mxu0 0
        %1459 = vmatpush.bf16.msra.mxu0 0
        %1460 = vmatpush.bf16.msra.mxu0 0
        %1461 = vmatpush.bf16.msra.mxu0 0
        %1462 = vmatpush.bf16.msra.mxu0 0
        %1463 = vmatpush.bf16.msra.mxu0 0
        %1464 = vmatpush.bf16.msra.mxu0 %v1455
        %1465 = vmatmul.bf16.gmra.mxu0 %v1452
        %v1466 = vpop.f32.mrf.mxu0
        %v1467 = vadd.f32 0.0, %v1466
        %v1468 = vpop.f32.mrf.mxu0
        %1469 = vdwg.mxu0
        %v1470 = vrot.slane %v1448, 4
        %v1471 = vsel %vm890, %v1470, %v1410
        %v1472 = vrot.slane %v1410, 4
        %v1473 = vsel %vm890, %v1448, %v1472
        %v1475 = vunpack.c.l.s4 1983009808
        %v1476 = vunpack.c.0.s8 %v1475
        %v1477 = vperm.slane %v1471, %v1476
        %v1479 = vunpack.c.l.s4 1983009808
        %v1480 = vunpack.c.0.s8 %v1479
        %v1481 = vperm.slane %v1473, %v1480
        %v1482 = vrot.slane %v1467, 4
        %v1483 = vsel %vm890, %v1482, %v1429
        %v1484 = vrot.slane %v1429, 4
        %v1485 = vsel %vm890, %v1467, %v1484
        %v1487 = vunpack.c.l.s4 1983009808
        %v1488 = vunpack.c.0.s8 %v1487
        %v1489 = vperm.slane %v1483, %v1488
        %v1491 = vunpack.c.l.s4 1983009808
        %v1492 = vunpack.c.0.s8 %v1491
        %v1493 = vperm.slane %v1485, %v1492
        %v1494 = vrot.slane %v1489, 4
        %v1495 = vsel %vm890, %v1494, %v1477
        %v1496 = vrot.slane %v1477, 4
        %v1497 = vsel %vm890, %v1489, %v1496
        %v1499 = vunpack.c.l.s4 1934713408
        %v1500 = vunpack.c.0.s8 %v1499
        %v1501 = vperm.slane %v1495, %v1500
        %v1503 = vunpack.c.l.s4 1934713408
        %v1504 = vunpack.c.0.s8 %v1503
        %v1505 = vperm.slane %v1497, %v1504
        %v1506 = vrot.slane %v1493, 4
        %v1507 = vsel %vm890, %v1506, %v1481
        %v1508 = vrot.slane %v1481, 4
        %v1509 = vsel %vm890, %v1493, %v1508
        %v1511 = vunpack.c.l.s4 1934713408
        %v1512 = vunpack.c.0.s8 %v1511
        %v1513 = vperm.slane %v1507, %v1512
        %v1515 = vunpack.c.l.s4 1934713408
        %v1516 = vunpack.c.0.s8 %v1515
        %v1517 = vperm.slane %v1509, %v1516
        %v1518 = vrot.slane %v1501, 4
        %v1519 = vsel %vm890, 0.0, %v1518
        %v1520 = vrot.slane %v1505, 4
        %v1521 = vsel %vm890, 0.0, %v1520
        %v1522 = vrot.slane %v1513, 4
        %v1523 = vsel %vm890, 0.0, %v1522
        %v1524 = vrot.slane %v1517, 4
        %v1525 = vsel %vm890, 0.0, %v1524
        %v1526 = vsel %vm890, %v1520, %v1501
        %v1528 = vunpack.c.l.s4 1983009808
        %v1529 = vunpack.c.0.s8 %v1528
        %v1530 = vperm.slane %v1526, %v1529
        %v1531 = vrot.slane %v1521, 4
        %v1532 = vsel %vm890, %v1531, %v1519
        %v1534 = vunpack.c.l.s4 1983009808
        %v1535 = vunpack.c.0.s8 %v1534
        %v1536 = vperm.slane %v1532, %v1535
        %v1537 = vsel %vm890, %v1524, %v1513
        %v1539 = vunpack.c.l.s4 1983009808
        %v1540 = vunpack.c.0.s8 %v1539
        %v1541 = vperm.slane %v1537, %v1540
        %v1542 = vrot.slane %v1525, 4
        %v1543 = vsel %vm890, %v1542, %v1523
        %v1545 = vunpack.c.l.s4 1983009808
        %v1546 = vunpack.c.0.s8 %v1545
        %v1547 = vperm.slane %v1543, %v1546
        %v1548 = vrot.slane %v1536, 4
        %v1549 = vsel %vm890, %v1548, %v1530
        %v1550 = vrot.slane %v1530, 4
        %v1551 = vsel %vm890, %v1536, %v1550
        %v1553 = vunpack.c.l.s4 1934713408
        %v1554 = vunpack.c.0.s8 %v1553
        %v1555 = vperm.slane %v1549, %v1554
        %v1557 = vunpack.c.l.s4 1934713408
        %v1558 = vunpack.c.0.s8 %v1557
        %v1559 = vperm.slane %v1551, %v1558
        %v1560 = vrot.slane %v1547, 4
        %v1561 = vsel %vm890, %v1560, %v1541
        %v1562 = vrot.slane %v1541, 4
        %v1563 = vsel %vm890, %v1547, %v1562
        %v1565 = vunpack.c.l.s4 1934713408
        %v1566 = vunpack.c.0.s8 %v1565
        %v1567 = vperm.slane %v1561, %v1566
        %v1569 = vunpack.c.l.s4 1934713408
        %v1570 = vunpack.c.0.s8 %v1569
        %v1571 = vperm.slane %v1563, %v1570
        %v1572 = vrot.slane %v1567, 4
        %v1573 = vsel %vm890, %v1572, %v1555
        %v1574 = vrot.slane %v1555, 4
        %v1575 = vsel %vm890, %v1567, %v1574
        %v1576 = vrot.slane %v1571, 4
        %v1577 = vsel %vm890, %v1576, %v1559
        %v1578 = vrot.slane %v1559, 4
        %v1579 = vsel %vm890, %v1571, %v1578
        %1581 = vrot.lane.b32.xlu0 %v1575, 16
        %v1582 = vpop.permute.xlu0 %1581
        %1585 = vrot.lane.b32.xlu0 %v1577, 32
        %v1586 = vpop.permute.xlu0 %1585
        %1589 = vrot.lane.b32.xlu0 %v1579, 48
        %v1590 = vpop.permute.xlu0 %1589
        %v1592 = vsel %vm1261, %v1573, %v1582
        %vm1593 = vcmask 261120
        %v1594 = vsel %vm1593, %v1592, %v1586
        %vm1595 = vcmask 392192
        %v1596 = vsel %vm1595, %v1594, %v1590
        %v1597 = vmul.f32 %v857, 0.25
        %1599 = vrot.lane.b32.xlu0 %v1597, 112
        %v1600 = vpop.permute.xlu0 %1599
        %1602 = vrot.lane.b32.xlu0 %v1597, 96
        %v1603 = vpop.permute.xlu0 %1602
        %1605 = vrot.lane.b32.xlu0 %v1597, 80
        %v1606 = vpop.permute.xlu0 %1605
        %v1608 = vrot.slane %v1603, 4
        %v1609 = vsel %vm890, %v1608, %v1597
        %v1610 = vrot.slane %v1597, 4
        %v1611 = vsel %vm890, %v1603, %v1610
        %v1613 = vunpack.c.l.s4 1983009808
        %v1614 = vunpack.c.0.s8 %v1613
        %v1615 = vperm.slane %v1609, %v1614
        %v1617 = vunpack.c.l.s4 1983009808
        %v1618 = vunpack.c.0.s8 %v1617
        %v1619 = vperm.slane %v1611, %v1618
        %v1620 = vrot.slane %v1606, 4
        %v1621 = vsel %vm890, %v1620, %v1600
        %v1622 = vrot.slane %v1600, 4
        %v1623 = vsel %vm890, %v1606, %v1622
        %v1625 = vunpack.c.l.s4 1983009808
        %v1626 = vunpack.c.0.s8 %v1625
        %v1627 = vperm.slane %v1621, %v1626
        %v1629 = vunpack.c.l.s4 1983009808
        %v1630 = vunpack.c.0.s8 %v1629
        %v1631 = vperm.slane %v1623, %v1630
        %v1632 = vrot.slane %v1627, 4
        %v1633 = vsel %vm890, %v1632, %v1615
        %v1634 = vrot.slane %v1615, 4
        %v1635 = vsel %vm890, %v1627, %v1634
        %v1637 = vunpack.c.l.s4 1934713408
        %v1638 = vunpack.c.0.s8 %v1637
        %v1639 = vperm.slane %v1633, %v1638
        %v1641 = vunpack.c.l.s4 1934713408
        %v1642 = vunpack.c.0.s8 %v1641
        %v1643 = vperm.slane %v1635, %v1642
        %v1644 = vrot.slane %v1631, 4
        %v1645 = vsel %vm890, %v1644, %v1619
        %v1646 = vrot.slane %v1619, 4
        %v1647 = vsel %vm890, %v1631, %v1646
        %v1649 = vunpack.c.l.s4 1934713408
        %v1650 = vunpack.c.0.s8 %v1649
        %v1651 = vperm.slane %v1645, %v1650
        %v1653 = vunpack.c.l.s4 1934713408
        %v1654 = vunpack.c.0.s8 %v1653
        %v1655 = vperm.slane %v1647, %v1654
        %v1656 = vrot.slane %v1639, 4
        %v1657 = vsel %vm890, 0.0, %v1656
        %v1658 = vrot.slane %v1643, 4
        %v1659 = vsel %vm890, 0.0, %v1658
        %v1660 = vrot.slane %v1651, 4
        %v1661 = vsel %vm890, 0.0, %v1660
        %v1662 = vrot.slane %v1655, 4
        %v1663 = vsel %vm890, 0.0, %v1662
        %1665 = vrot.lane.b32.xlu0 %v857, 112
        %v1666 = vpop.permute.xlu0 %1665
        %1667 = vrot.lane.b32.xlu0 %v857, 96
        %v1668 = vpop.permute.xlu0 %1667
        %1669 = vrot.lane.b32.xlu0 %v857, 80
        %v1670 = vpop.permute.xlu0 %1669
        %1671 = vrot.lane.b32.xlu0 %v857, 64
        %v1672 = vpop.permute.xlu0 %1671
        %1673 = vrot.lane.b32.xlu0 %v1666, 64
        %v1674 = vpop.permute.xlu0 %1673
        %1675 = vrot.lane.b32.xlu0 %v1668, 64
        %v1676 = vpop.permute.xlu0 %1675
        %1677 = vrot.lane.b32.xlu0 %v1670, 64
        %v1678 = vpop.permute.xlu0 %1677
        %v1683 = vrot.slane %v1676, 4
        %v1684 = vsel %vm890, %v1683, %v1672
        %v1685 = vrot.slane %v1672, 4
        %v1686 = vsel %vm890, %v1676, %v1685
        %v1688 = vunpack.c.l.s4 1983009808
        %v1689 = vunpack.c.0.s8 %v1688
        %v1690 = vperm.slane %v1684, %v1689
        %v1692 = vunpack.c.l.s4 1983009808
        %v1693 = vunpack.c.0.s8 %v1692
        %v1694 = vperm.slane %v1686, %v1693
        %v1695 = vrot.slane %v1678, 4
        %v1696 = vsel %vm890, %v1695, %v1674
        %v1697 = vrot.slane %v1674, 4
        %v1698 = vsel %vm890, %v1678, %v1697
        %v1700 = vunpack.c.l.s4 1983009808
        %v1701 = vunpack.c.0.s8 %v1700
        %v1702 = vperm.slane %v1696, %v1701
        %v1704 = vunpack.c.l.s4 1983009808
        %v1705 = vunpack.c.0.s8 %v1704
        %v1706 = vperm.slane %v1698, %v1705
        %v1707 = vrot.slane %v1702, 4
        %v1708 = vsel %vm890, %v1707, %v1690
        %v1709 = vrot.slane %v1690, 4
        %v1710 = vsel %vm890, %v1702, %v1709
        %v1712 = vunpack.c.l.s4 1934713408
        %v1713 = vunpack.c.0.s8 %v1712
        %v1714 = vperm.slane %v1708, %v1713
        %v1716 = vunpack.c.l.s4 1934713408
        %v1717 = vunpack.c.0.s8 %v1716
        %v1718 = vperm.slane %v1710, %v1717
        %v1719 = vrot.slane %v1706, 4
        %v1720 = vsel %vm890, %v1719, %v1694
        %v1721 = vrot.slane %v1694, 4
        %v1722 = vsel %vm890, %v1706, %v1721
        %v1724 = vunpack.c.l.s4 1934713408
        %v1725 = vunpack.c.0.s8 %v1724
        %v1726 = vperm.slane %v1720, %v1725
        %v1728 = vunpack.c.l.s4 1934713408
        %v1729 = vunpack.c.0.s8 %v1728
        %v1730 = vperm.slane %v1722, %v1729
        %v1731 = vrot.slane %v1714, 4
        %v1732 = vsel %vm890, 0.0, %v1731
        %v1733 = vrot.slane %v1718, 4
        %v1734 = vsel %vm890, 0.0, %v1733
        %v1735 = vrot.slane %v1726, 4
        %v1736 = vsel %vm890, 0.0, %v1735
        %v1737 = vrot.slane %v1730, 4
        %v1738 = vsel %vm890, 0.0, %v1737
        %1740 = vrot.lane.b32.xlu0 %v871, 112
        %v1741 = vpop.permute.xlu0 %1740
        %1743 = vrot.lane.b32.xlu0 %v871, 96
        %v1744 = vpop.permute.xlu0 %1743
        %1746 = vrot.lane.b32.xlu0 %v871, 80
        %v1747 = vpop.permute.xlu0 %1746
        %v1749 = vrot.slane %v1744, 4
        %v1750 = vsel %vm890, %v1749, %v871
        %v1751 = vrot.slane %v871, 4
        %v1752 = vsel %vm890, %v1744, %v1751
        %v1754 = vunpack.c.l.s4 1983009808
        %v1755 = vunpack.c.0.s8 %v1754
        %v1756 = vperm.slane %v1750, %v1755
        %v1758 = vunpack.c.l.s4 1983009808
        %v1759 = vunpack.c.0.s8 %v1758
        %v1760 = vperm.slane %v1752, %v1759
        %v1761 = vrot.slane %v1747, 4
        %v1762 = vsel %vm890, %v1761, %v1741
        %v1763 = vrot.slane %v1741, 4
        %v1764 = vsel %vm890, %v1747, %v1763
        %v1766 = vunpack.c.l.s4 1983009808
        %v1767 = vunpack.c.0.s8 %v1766
        %v1768 = vperm.slane %v1762, %v1767
        %v1770 = vunpack.c.l.s4 1983009808
        %v1771 = vunpack.c.0.s8 %v1770
        %v1772 = vperm.slane %v1764, %v1771
        %v1773 = vrot.slane %v1768, 4
        %v1774 = vsel %vm890, %v1773, %v1756
        %v1775 = vrot.slane %v1756, 4
        %v1776 = vsel %vm890, %v1768, %v1775
        %v1778 = vunpack.c.l.s4 1934713408
        %v1779 = vunpack.c.0.s8 %v1778
        %v1780 = vperm.slane %v1774, %v1779
        %v1782 = vunpack.c.l.s4 1934713408
        %v1783 = vunpack.c.0.s8 %v1782
        %v1784 = vperm.slane %v1776, %v1783
        %v1785 = vrot.slane %v1772, 4
        %v1786 = vsel %vm890, %v1785, %v1760
        %v1787 = vrot.slane %v1760, 4
        %v1788 = vsel %vm890, %v1772, %v1787
        %v1790 = vunpack.c.l.s4 1934713408
        %v1791 = vunpack.c.0.s8 %v1790
        %v1792 = vperm.slane %v1786, %v1791
        %v1794 = vunpack.c.l.s4 1934713408
        %v1795 = vunpack.c.0.s8 %v1794
        %v1796 = vperm.slane %v1788, %v1795
        %v1797 = vrot.slane %v1780, 4
        %v1798 = vsel %vm890, 0.0, %v1797
        %v1799 = vrot.slane %v1784, 4
        %v1800 = vsel %vm890, 0.0, %v1799
        %v1801 = vrot.slane %v1792, 4
        %v1802 = vsel %vm890, 0.0, %v1801
        %v1803 = vrot.slane %v1796, 4
        %v1804 = vsel %vm890, 0.0, %v1803
        %v1805 = vsel %vm890, %v1658, %v1639
        %v1807 = vunpack.c.l.s4 1983009808
        %v1808 = vunpack.c.0.s8 %v1807
        %v1809 = vperm.slane %v1805, %v1808
        %v1810 = vrot.slane %v1659, 4
        %v1811 = vsel %vm890, %v1810, %v1657
        %v1813 = vunpack.c.l.s4 1983009808
        %v1814 = vunpack.c.0.s8 %v1813
        %v1815 = vperm.slane %v1811, %v1814
        %v1816 = vsel %vm890, %v1662, %v1651
        %v1818 = vunpack.c.l.s4 1983009808
        %v1819 = vunpack.c.0.s8 %v1818
        %v1820 = vperm.slane %v1816, %v1819
        %v1821 = vrot.slane %v1663, 4
        %v1822 = vsel %vm890, %v1821, %v1661
        %v1824 = vunpack.c.l.s4 1983009808
        %v1825 = vunpack.c.0.s8 %v1824
        %v1826 = vperm.slane %v1822, %v1825
        %v1827 = vrot.slane %v1815, 4
        %v1828 = vsel %vm890, %v1827, %v1809
        %v1829 = vrot.slane %v1809, 4
        %v1830 = vsel %vm890, %v1815, %v1829
        %v1832 = vunpack.c.l.s4 1934713408
        %v1833 = vunpack.c.0.s8 %v1832
        %v1834 = vperm.slane %v1828, %v1833
        %v1836 = vunpack.c.l.s4 1934713408
        %v1837 = vunpack.c.0.s8 %v1836
        %v1838 = vperm.slane %v1830, %v1837
        %v1839 = vrot.slane %v1826, 4
        %v1840 = vsel %vm890, %v1839, %v1820
        %v1841 = vrot.slane %v1820, 4
        %v1842 = vsel %vm890, %v1826, %v1841
        %v1844 = vunpack.c.l.s4 1934713408
        %v1845 = vunpack.c.0.s8 %v1844
        %v1846 = vperm.slane %v1840, %v1845
        %v1848 = vunpack.c.l.s4 1934713408
        %v1849 = vunpack.c.0.s8 %v1848
        %v1850 = vperm.slane %v1842, %v1849
        %v1851 = vrot.slane %v1846, 4
        %v1852 = vsel %vm890, %v1851, %v1834
        %v1853 = vrot.slane %v1834, 4
        %v1854 = vsel %vm890, %v1846, %v1853
        %v1855 = vrot.slane %v1850, 4
        %v1856 = vsel %vm890, %v1855, %v1838
        %v1857 = vrot.slane %v1838, 4
        %v1858 = vsel %vm890, %v1850, %v1857
        %v1859 = vpack.c.bf16 %v1852, %v1852
        %v1860 = vpack.c.bf16 %v1854, %v1854
        %v1861 = vpack.c.bf16 %v1856, %v1856
        %v1862 = vpack.c.bf16 %v1858, %v1858
        %v1863 = vsel %vm890, %v1733, %v1714
        %v1865 = vunpack.c.l.s4 1983009808
        %v1866 = vunpack.c.0.s8 %v1865
        %v1867 = vperm.slane %v1863, %v1866
        %v1868 = vrot.slane %v1734, 4
        %v1869 = vsel %vm890, %v1868, %v1732
        %v1871 = vunpack.c.l.s4 1983009808
        %v1872 = vunpack.c.0.s8 %v1871
        %v1873 = vperm.slane %v1869, %v1872
        %v1874 = vsel %vm890, %v1737, %v1726
        %v1876 = vunpack.c.l.s4 1983009808
        %v1877 = vunpack.c.0.s8 %v1876
        %v1878 = vperm.slane %v1874, %v1877
        %v1879 = vrot.slane %v1738, 4
        %v1880 = vsel %vm890, %v1879, %v1736
        %v1882 = vunpack.c.l.s4 1983009808
        %v1883 = vunpack.c.0.s8 %v1882
        %v1884 = vperm.slane %v1880, %v1883
        %v1885 = vrot.slane %v1873, 4
        %v1886 = vsel %vm890, %v1885, %v1867
        %v1887 = vrot.slane %v1867, 4
        %v1888 = vsel %vm890, %v1873, %v1887
        %v1890 = vunpack.c.l.s4 1934713408
        %v1891 = vunpack.c.0.s8 %v1890
        %v1892 = vperm.slane %v1886, %v1891
        %v1894 = vunpack.c.l.s4 1934713408
        %v1895 = vunpack.c.0.s8 %v1894
        %v1896 = vperm.slane %v1888, %v1895
        %v1897 = vrot.slane %v1884, 4
        %v1898 = vsel %vm890, %v1897, %v1878
        %v1899 = vrot.slane %v1878, 4
        %v1900 = vsel %vm890, %v1884, %v1899
        %v1902 = vunpack.c.l.s4 1934713408
        %v1903 = vunpack.c.0.s8 %v1902
        %v1904 = vperm.slane %v1898, %v1903
        %v1906 = vunpack.c.l.s4 1934713408
        %v1907 = vunpack.c.0.s8 %v1906
        %v1908 = vperm.slane %v1900, %v1907
        %v1909 = vrot.slane %v1904, 4
        %v1910 = vsel %vm890, %v1909, %v1892
        %v1911 = vrot.slane %v1892, 4
        %v1912 = vsel %vm890, %v1904, %v1911
        %v1913 = vrot.slane %v1908, 4
        %v1914 = vsel %vm890, %v1913, %v1896
        %v1915 = vrot.slane %v1896, 4
        %v1916 = vsel %vm890, %v1908, %v1915
        %v1917 = vpack.c.bf16 %v1910, %v1910
        %v1918 = vpack.c.bf16 %v1912, %v1912
        %v1919 = vpack.c.bf16 %v1914, %v1914
        %v1920 = vpack.c.bf16 %v1916, %v1916
        %v1921 = vsel %vm890, %v1799, %v1780
        %v1923 = vunpack.c.l.s4 1983009808
        %v1924 = vunpack.c.0.s8 %v1923
        %v1925 = vperm.slane %v1921, %v1924
        %v1926 = vrot.slane %v1800, 4
        %v1927 = vsel %vm890, %v1926, %v1798
        %v1929 = vunpack.c.l.s4 1983009808
        %v1930 = vunpack.c.0.s8 %v1929
        %v1931 = vperm.slane %v1927, %v1930
        %v1932 = vsel %vm890, %v1803, %v1792
        %v1934 = vunpack.c.l.s4 1983009808
        %v1935 = vunpack.c.0.s8 %v1934
        %v1936 = vperm.slane %v1932, %v1935
        %v1937 = vrot.slane %v1804, 4
        %v1938 = vsel %vm890, %v1937, %v1802
        %v1940 = vunpack.c.l.s4 1983009808
        %v1941 = vunpack.c.0.s8 %v1940
        %v1942 = vperm.slane %v1938, %v1941
        %v1943 = vrot.slane %v1931, 4
        %v1944 = vsel %vm890, %v1943, %v1925
        %v1945 = vrot.slane %v1925, 4
        %v1946 = vsel %vm890, %v1931, %v1945
        %v1948 = vunpack.c.l.s4 1934713408
        %v1949 = vunpack.c.0.s8 %v1948
        %v1950 = vperm.slane %v1944, %v1949
        %v1952 = vunpack.c.l.s4 1934713408
        %v1953 = vunpack.c.0.s8 %v1952
        %v1954 = vperm.slane %v1946, %v1953
        %v1955 = vrot.slane %v1942, 4
        %v1956 = vsel %vm890, %v1955, %v1936
        %v1957 = vrot.slane %v1936, 4
        %v1958 = vsel %vm890, %v1942, %v1957
        %v1960 = vunpack.c.l.s4 1934713408
        %v1961 = vunpack.c.0.s8 %v1960
        %v1962 = vperm.slane %v1956, %v1961
        %v1964 = vunpack.c.l.s4 1934713408
        %v1965 = vunpack.c.0.s8 %v1964
        %v1966 = vperm.slane %v1958, %v1965
        %v1967 = vrot.slane %v1962, 4
        %v1968 = vsel %vm890, %v1967, %v1950
        %v1969 = vrot.slane %v1950, 4
        %v1970 = vsel %vm890, %v1962, %v1969
        %v1971 = vrot.slane %v1966, 4
        %v1972 = vsel %vm890, %v1971, %v1954
        %v1973 = vrot.slane %v1954, 4
        %v1974 = vsel %vm890, %v1966, %v1973
        %v1975 = vpack.c.bf16 %v1968, %v1968
        %v1976 = vpack.c.bf16 %v1970, %v1970
        %v1977 = vpack.c.bf16 %v1972, %v1972
        %v1978 = vpack.c.bf16 %v1974, %v1974
        %v1980 = vsel %vm1261, %v1859, 0
        %v1983 = vsel %vm1261, %v1917, 0
        %1985 = vmatpush.bf16.xpose.msra.mxu0 0
        %1986 = vmatpush.bf16.xpose.msra.mxu0 0
        %1987 = vmatpush.bf16.xpose.msra.mxu0 0
        %1988 = vmatpush.bf16.xpose.msra.mxu0 0
        %1989 = vmatpush.bf16.xpose.msra.mxu0 0
        %1990 = vmatpush.bf16.xpose.msra.mxu0 0
        %1991 = vmatpush.bf16.xpose.msra.mxu0 0
        %1992 = vmatpush.bf16.xpose.msra.mxu0 %v1983
        %1993 = vmatmul.bf16.gmra.mxu0 %v1980
        %v1994 = vpop.f32.mrf.mxu0
        %v1995 = vadd.f32 0.0, %v1994
        %v1996 = vpop.f32.mrf.mxu0
        %1997 = vdwg.mxu0
        %v1999 = vsel %vm1261, %v1860, 0
        %v2002 = vsel %vm1261, %v1918, 0
        %2004 = vmatpush.bf16.xpose.msra.mxu0 0
        %2005 = vmatpush.bf16.xpose.msra.mxu0 0
        %2006 = vmatpush.bf16.xpose.msra.mxu0 0
        %2007 = vmatpush.bf16.xpose.msra.mxu0 0
        %2008 = vmatpush.bf16.xpose.msra.mxu0 0
        %2009 = vmatpush.bf16.xpose.msra.mxu0 0
        %2010 = vmatpush.bf16.xpose.msra.mxu0 0
        %2011 = vmatpush.bf16.xpose.msra.mxu0 %v2002
        %2012 = vmatmul.bf16.gmra.mxu0 %v1999
        %v2013 = vpop.f32.mrf.mxu0
        %v2014 = vadd.f32 0.0, %v2013
        %v2015 = vpop.f32.mrf.mxu0
        %2016 = vdwg.mxu0
        %v2018 = vsel %vm1261, %v1861, 0
        %v2021 = vsel %vm1261, %v1919, 0
        %2023 = vmatpush.bf16.xpose.msra.mxu0 0
        %2024 = vmatpush.bf16.xpose.msra.mxu0 0
        %2025 = vmatpush.bf16.xpose.msra.mxu0 0
        %2026 = vmatpush.bf16.xpose.msra.mxu0 0
        %2027 = vmatpush.bf16.xpose.msra.mxu0 0
        %2028 = vmatpush.bf16.xpose.msra.mxu0 0
        %2029 = vmatpush.bf16.xpose.msra.mxu0 0
        %2030 = vmatpush.bf16.xpose.msra.mxu0 %v2021
        %2031 = vmatmul.bf16.gmra.mxu0 %v2018
        %v2032 = vpop.f32.mrf.mxu0
        %v2033 = vadd.f32 0.0, %v2032
        %v2034 = vpop.f32.mrf.mxu0
        %2035 = vdwg.mxu0
        %v2037 = vsel %vm1261, %v1862, 0
        %v2040 = vsel %vm1261, %v1920, 0
        %2042 = vmatpush.bf16.xpose.msra.mxu0 0
        %2043 = vmatpush.bf16.xpose.msra.mxu0 0
        %2044 = vmatpush.bf16.xpose.msra.mxu0 0
        %2045 = vmatpush.bf16.xpose.msra.mxu0 0
        %2046 = vmatpush.bf16.xpose.msra.mxu0 0
        %2047 = vmatpush.bf16.xpose.msra.mxu0 0
        %2048 = vmatpush.bf16.xpose.msra.mxu0 0
        %2049 = vmatpush.bf16.xpose.msra.mxu0 %v2040
        %2050 = vmatmul.bf16.gmra.mxu0 %v2037
        %v2051 = vpop.f32.mrf.mxu0
        %v2052 = vadd.f32 0.0, %v2051
        %v2053 = vpop.f32.mrf.mxu0
        %2054 = vdwg.mxu0
        %v2055 = vsel %vm1339, -1e+30, %v1995
        %v2056 = vsel %vm1339, -1e+30, %v2014
        %v2057 = vsel %vm1339, -1e+30, %v2033
        %v2058 = vsel %vm1339, -1e+30, %v2052
        %v2059 = vsel %vm1344, %v2055, -inf
        %2060 = vmax.xlane.f32.xlu0 %v2059
        %v2061 = vpop.xlane.xlu0 %2060
        %v2062 = vsel %vm1344, %v2056, -inf
        %2063 = vmax.xlane.f32.xlu0 %v2062
        %v2064 = vpop.xlane.xlu0 %2063
        %v2065 = vsel %vm1344, %v2057, -inf
        %2066 = vmax.xlane.f32.xlu0 %v2065
        %v2067 = vpop.xlane.xlu0 %2066
        %v2068 = vsel %vm1344, %v2058, -inf
        %2069 = vmax.xlane.f32.xlu0 %v2068
        %v2070 = vpop.xlane.xlu0 %2069
        %v2071 = vsub.f32 %v2055, %v2061
        %v2072 = vsub.f32 %v2056, %v2064
        %v2073 = vsub.f32 %v2057, %v2067
        %v2074 = vsub.f32 %v2058, %v2070
        %v2075 = vmul.f32 %v2071, 1.442695
        %v2076 = vpow.pop %v2075
        %v2077 = vmul.f32 %v2072, 1.442695
        %v2078 = vpow.pop %v2077
        %v2079 = vmul.f32 %v2073, 1.442695
        %v2080 = vpow.pop %v2079
        %v2081 = vmul.f32 %v2074, 1.442695
        %v2082 = vpow.pop %v2081
        %v2083 = vsel %vm1344, %v2076, 0.0
        %2084 = vadd.xlane.f32.xlu0 %v2083
        %v2085 = vpop.xlane.xlu0 %2084
        %v2086 = vsel %vm1344, %v2078, 0.0
        %2087 = vadd.xlane.f32.xlu0 %v2086
        %v2088 = vpop.xlane.xlu0 %2087
        %v2089 = vsel %vm1344, %v2080, 0.0
        %2090 = vadd.xlane.f32.xlu0 %v2089
        %v2091 = vpop.xlane.xlu0 %2090
        %v2092 = vsel %vm1344, %v2082, 0.0
        %2093 = vadd.xlane.f32.xlu0 %v2092
        %v2094 = vpop.xlane.xlu0 %2093
        %v2095 = vrcp.pop %v2085
        %v2096 = vrcp.pop %v2088
        %v2097 = vrcp.pop %v2091
        %v2098 = vrcp.pop %v2094
        %v2099 = vmul.f32 %v2076, %v2095
        %v2100 = vmul.f32 %v2078, %v2096
        %v2101 = vmul.f32 %v2080, %v2097
        %v2102 = vmul.f32 %v2082, %v2098
        %v2103 = vpack.c.bf16 %v2099, %v2099
        %v2104 = vpack.c.bf16 %v2100, %v2100
        %v2105 = vpack.c.bf16 %v2101, %v2101
        %v2106 = vpack.c.bf16 %v2102, %v2102
        %v2108 = vsel %vm1344, %v2103, 0
        %v2111 = vsel %vm1396, %v1975, 0
        %2113 = vmatpush.bf16.msra.mxu0 0
        %2114 = vmatpush.bf16.msra.mxu0 0
        %2115 = vmatpush.bf16.msra.mxu0 0
        %2116 = vmatpush.bf16.msra.mxu0 0
        %2117 = vmatpush.bf16.msra.mxu0 0
        %2118 = vmatpush.bf16.msra.mxu0 0
        %2119 = vmatpush.bf16.msra.mxu0 0
        %2120 = vmatpush.bf16.msra.mxu0 %v2111
        %2121 = vmatmul.bf16.gmra.mxu0 %v2108
        %v2122 = vpop.f32.mrf.mxu0
        %v2123 = vadd.f32 0.0, %v2122
        %v2124 = vpop.f32.mrf.mxu0
        %2125 = vdwg.mxu0
        %v2127 = vsel %vm1344, %v2104, 0
        %v2130 = vsel %vm1396, %v1976, 0
        %2132 = vmatpush.bf16.msra.mxu0 0
        %2133 = vmatpush.bf16.msra.mxu0 0
        %2134 = vmatpush.bf16.msra.mxu0 0
        %2135 = vmatpush.bf16.msra.mxu0 0
        %2136 = vmatpush.bf16.msra.mxu0 0
        %2137 = vmatpush.bf16.msra.mxu0 0
        %2138 = vmatpush.bf16.msra.mxu0 0
        %2139 = vmatpush.bf16.msra.mxu0 %v2130
        %2140 = vmatmul.bf16.gmra.mxu0 %v2127
        %v2141 = vpop.f32.mrf.mxu0
        %v2142 = vadd.f32 0.0, %v2141
        %v2143 = vpop.f32.mrf.mxu0
        %2144 = vdwg.mxu0
        %v2146 = vsel %vm1344, %v2105, 0
        %v2149 = vsel %vm1396, %v1977, 0
        %2151 = vmatpush.bf16.msra.mxu0 0
        %2152 = vmatpush.bf16.msra.mxu0 0
        %2153 = vmatpush.bf16.msra.mxu0 0
        %2154 = vmatpush.bf16.msra.mxu0 0
        %2155 = vmatpush.bf16.msra.mxu0 0
        %2156 = vmatpush.bf16.msra.mxu0 0
        %2157 = vmatpush.bf16.msra.mxu0 0
        %2158 = vmatpush.bf16.msra.mxu0 %v2149
        %2159 = vmatmul.bf16.gmra.mxu0 %v2146
        %v2160 = vpop.f32.mrf.mxu0
        %v2161 = vadd.f32 0.0, %v2160
        %v2162 = vpop.f32.mrf.mxu0
        %2163 = vdwg.mxu0
        %v2165 = vsel %vm1344, %v2106, 0
        %v2168 = vsel %vm1396, %v1978, 0
        %2170 = vmatpush.bf16.msra.mxu0 0
        %2171 = vmatpush.bf16.msra.mxu0 0
        %2172 = vmatpush.bf16.msra.mxu0 0
        %2173 = vmatpush.bf16.msra.mxu0 0
        %2174 = vmatpush.bf16.msra.mxu0 0
        %2175 = vmatpush.bf16.msra.mxu0 0
        %2176 = vmatpush.bf16.msra.mxu0 0
        %2177 = vmatpush.bf16.msra.mxu0 %v2168
        %2178 = vmatmul.bf16.gmra.mxu0 %v2165
        %v2179 = vpop.f32.mrf.mxu0
        %v2180 = vadd.f32 0.0, %v2179
        %v2181 = vpop.f32.mrf.mxu0
        %2182 = vdwg.mxu0
        %v2183 = vrot.slane %v2161, 4
        %v2184 = vsel %vm890, %v2183, %v2123
        %v2185 = vrot.slane %v2123, 4
        %v2186 = vsel %vm890, %v2161, %v2185
        %v2188 = vunpack.c.l.s4 1983009808
        %v2189 = vunpack.c.0.s8 %v2188
        %v2190 = vperm.slane %v2184, %v2189
        %v2192 = vunpack.c.l.s4 1983009808
        %v2193 = vunpack.c.0.s8 %v2192
        %v2194 = vperm.slane %v2186, %v2193
        %v2195 = vrot.slane %v2180, 4
        %v2196 = vsel %vm890, %v2195, %v2142
        %v2197 = vrot.slane %v2142, 4
        %v2198 = vsel %vm890, %v2180, %v2197
        %v2200 = vunpack.c.l.s4 1983009808
        %v2201 = vunpack.c.0.s8 %v2200
        %v2202 = vperm.slane %v2196, %v2201
        %v2204 = vunpack.c.l.s4 1983009808
        %v2205 = vunpack.c.0.s8 %v2204
        %v2206 = vperm.slane %v2198, %v2205
        %v2207 = vrot.slane %v2202, 4
        %v2208 = vsel %vm890, %v2207, %v2190
        %v2209 = vrot.slane %v2190, 4
        %v2210 = vsel %vm890, %v2202, %v2209
        %v2212 = vunpack.c.l.s4 1934713408
        %v2213 = vunpack.c.0.s8 %v2212
        %v2214 = vperm.slane %v2208, %v2213
        %v2216 = vunpack.c.l.s4 1934713408
        %v2217 = vunpack.c.0.s8 %v2216
        %v2218 = vperm.slane %v2210, %v2217
        %v2219 = vrot.slane %v2206, 4
        %v2220 = vsel %vm890, %v2219, %v2194
        %v2221 = vrot.slane %v2194, 4
        %v2222 = vsel %vm890, %v2206, %v2221
        %v2224 = vunpack.c.l.s4 1934713408
        %v2225 = vunpack.c.0.s8 %v2224
        %v2226 = vperm.slane %v2220, %v2225
        %v2228 = vunpack.c.l.s4 1934713408
        %v2229 = vunpack.c.0.s8 %v2228
        %v2230 = vperm.slane %v2222, %v2229
        %v2231 = vrot.slane %v2214, 4
        %v2232 = vsel %vm890, 0.0, %v2231
        %v2233 = vrot.slane %v2218, 4
        %v2234 = vsel %vm890, 0.0, %v2233
        %v2235 = vrot.slane %v2226, 4
        %v2236 = vsel %vm890, 0.0, %v2235
        %v2237 = vrot.slane %v2230, 4
        %v2238 = vsel %vm890, 0.0, %v2237
        %v2239 = vsel %vm890, %v2233, %v2214
        %v2241 = vunpack.c.l.s4 1983009808
        %v2242 = vunpack.c.0.s8 %v2241
        %v2243 = vperm.slane %v2239, %v2242
        %v2244 = vrot.slane %v2234, 4
        %v2245 = vsel %vm890, %v2244, %v2232
        %v2247 = vunpack.c.l.s4 1983009808
        %v2248 = vunpack.c.0.s8 %v2247
        %v2249 = vperm.slane %v2245, %v2248
        %v2250 = vsel %vm890, %v2237, %v2226
        %v2252 = vunpack.c.l.s4 1983009808
        %v2253 = vunpack.c.0.s8 %v2252
        %v2254 = vperm.slane %v2250, %v2253
        %v2255 = vrot.slane %v2238, 4
        %v2256 = vsel %vm890, %v2255, %v2236
        %v2258 = vunpack.c.l.s4 1983009808
        %v2259 = vunpack.c.0.s8 %v2258
        %v2260 = vperm.slane %v2256, %v2259
        %v2261 = vrot.slane %v2249, 4
        %v2262 = vsel %vm890, %v2261, %v2243
        %v2263 = vrot.slane %v2243, 4
        %v2264 = vsel %vm890, %v2249, %v2263
        %v2266 = vunpack.c.l.s4 1934713408
        %v2267 = vunpack.c.0.s8 %v2266
        %v2268 = vperm.slane %v2262, %v2267
        %v2270 = vunpack.c.l.s4 1934713408
        %v2271 = vunpack.c.0.s8 %v2270
        %v2272 = vperm.slane %v2264, %v2271
        %v2273 = vrot.slane %v2260, 4
        %v2274 = vsel %vm890, %v2273, %v2254
        %v2275 = vrot.slane %v2254, 4
        %v2276 = vsel %vm890, %v2260, %v2275
        %v2278 = vunpack.c.l.s4 1934713408
        %v2279 = vunpack.c.0.s8 %v2278
        %v2280 = vperm.slane %v2274, %v2279
        %v2282 = vunpack.c.l.s4 1934713408
        %v2283 = vunpack.c.0.s8 %v2282
        %v2284 = vperm.slane %v2276, %v2283
        %v2285 = vrot.slane %v2280, 4
        %v2286 = vsel %vm890, %v2285, %v2268
        %v2287 = vrot.slane %v2268, 4
        %v2288 = vsel %vm890, %v2280, %v2287
        %v2289 = vrot.slane %v2284, 4
        %v2290 = vsel %vm890, %v2289, %v2272
        %v2291 = vrot.slane %v2272, 4
        %v2292 = vsel %vm890, %v2284, %v2291
        %2294 = vrot.lane.b32.xlu0 %v2288, 16
        %v2295 = vpop.permute.xlu0 %2294
        %2298 = vrot.lane.b32.xlu0 %v2290, 32
        %v2299 = vpop.permute.xlu0 %2298
        %2302 = vrot.lane.b32.xlu0 %v2292, 48
        %v2303 = vpop.permute.xlu0 %2302
        %v2305 = vsel %vm1261, %v2286, %v2295
        %v2306 = vsel %vm1593, %v2305, %v2299
        %v2307 = vsel %vm1595, %v2306, %v2303
        %v2308 = vpack.c.bf16 %v2307, %v1596
        %v2309 = vld [vmem:[%s678] sm:$0xf]
        %v2310 = vld [vmem:[%s678 + $0x4] sm:$0xf]
        %v2311 = vld [vmem:[%s678 + $0x8] sm:$0xf]
        %v2312 = vld [vmem:[%s678 + $0xc] sm:$0xf]
        %v2313 = vld [vmem:[%s678 + $0x10] sm:$0xf]
        %v2314 = vld [vmem:[%s678 + $0x14] sm:$0xf]
        %v2315 = vld [vmem:[%s678 + $0x18] sm:$0xf]
        %v2316 = vld [vmem:[%s678 + $0x1c] sm:$0xf]
        %v2317 = vld [vmem:[%s681] sm:$0x1]
        %v2319 = vperm.slane %v2317, 0
        %v2329 = vunpack.c.l.b16 %v2309
        %v2330 = vunpack.c.l.b16 %v2310
        %v2331 = vunpack.c.l.b16 %v2311
        %v2332 = vunpack.c.l.b16 %v2312
        %v2333 = vunpack.c.l.b16 %v2313
        %v2334 = vunpack.c.l.b16 %v2314
        %v2335 = vunpack.c.l.b16 %v2315
        %v2336 = vunpack.c.l.b16 %v2316
        %v2337 = vpack.c.b16 %v2330, %v2329
        %v2338 = vpack.c.b16 %v2332, %v2331
        %v2339 = vpack.c.b16 %v2334, %v2333
        %v2340 = vpack.c.b16 %v2336, %v2335
        %v2346 = vsel %vm721, %v2308, 0
        %2348 = vmatpush.bf16.msra.mxu0 0
        %2349 = vmatpush.bf16.msra.mxu0 0
        %2350 = vmatpush.bf16.msra.mxu0 0
        %2351 = vmatpush.bf16.msra.mxu0 0
        %2352 = vmatpush.bf16.msra.mxu0 %v2340
        %2353 = vmatpush.bf16.msra.mxu0 %v2339
        %2354 = vmatpush.bf16.msra.mxu0 %v2338
        %2355 = vmatpush.bf16.msra.mxu0 %v2337
        %2356 = vmatmul.bf16.gmra.mxu0 %v2346
        %v2357 = vpop.f32.mrf.mxu0
        %v2358 = vadd.f32 %v2319, %v2357
        %v2359 = vpop.f32.mrf.mxu0
        %v2360 = vadd.f32 %v2319, %v2359
        %2361 = vdwg.mxu0
        %v2362 = vadd.f32 %v717, %v2358
        %v2363 = vadd.f32 %v718, %v2360
        %v2364 = vld [vmem:[%s684] sm:$0x1]
        %v2365 = vld [vmem:[%s687] sm:$0x1]
        %v2366 = vsel %vm721, %v2362, 0.0
        %2367 = vadd.xlane.f32.xlu0 %v2366
        %v2368 = vpop.xlane.xlu0 %2367
        %v2369 = vsel %vm721, %v2363, 0.0
        %2370 = vadd.xlane.f32.xlu0 %v2369
        %v2371 = vpop.xlane.xlu0 %2370
        %v2372 = vmul.f32 %v2368, %v734
        %v2373 = vmul.f32 %v2371, %v734
        %v2374 = vmul.f32 %v2362, %v2362
        %v2375 = vmul.f32 %v2363, %v2363
        %v2376 = vsel %vm721, %v2374, 0.0
        %2377 = vadd.xlane.f32.xlu0 %v2376
        %v2378 = vpop.xlane.xlu0 %2377
        %v2379 = vsel %vm721, %v2375, 0.0
        %2380 = vadd.xlane.f32.xlu0 %v2379
        %v2381 = vpop.xlane.xlu0 %2380
        %v2382 = vmul.f32 %v2378, %v734
        %v2383 = vmul.f32 %v2381, %v734
        %v2384 = vmul.f32 %v2372, %v2372
        %v2385 = vmul.f32 %v2373, %v2373
        %v2386 = vsub.f32 %v2382, %v2384
        %v2387 = vsub.f32 %v2383, %v2385
        %v2388 = vsub.f32 %v2362, %v2372
        %v2389 = vsub.f32 %v2363, %v2373
        %v2390 = vadd.f32 %v2386, 1e-05
        %v2391 = vadd.f32 %v2387, 1e-05
        %v2392 = vrsqrt.pop %v2390
        %v2393 = vmul.f32 %v2392, %v2390
        %v2394 = vmul.f32 %v2393, %v2392
        %v2395 = vmul.f32 0.5, %v2394
        %v2396 = vsub.f32 1.5, %v2395
        %v2397 = vmul.f32 %v2392, %v2396
        %vm2398 = vweird.f32 %v2390
        %vm2399 = vweird.f32 %v2392
        %vm2400 = vmor %vm2398, %vm2399
        %v2401 = vsel %vm2400, %v2392, %v2397
        %v2402 = vrsqrt.pop %v2391
        %v2403 = vmul.f32 %v2402, %v2391
        %v2404 = vmul.f32 %v2403, %v2402
        %v2405 = vmul.f32 0.5, %v2404
        %v2406 = vsub.f32 1.5, %v2405
        %v2407 = vmul.f32 %v2402, %v2406
        %vm2408 = vweird.f32 %v2391
        %vm2409 = vweird.f32 %v2402
        %vm2410 = vmor %vm2408, %vm2409
        %v2411 = vsel %vm2410, %v2402, %v2407
        %v2412 = vmul.f32 %v2388, %v2401
        %v2413 = vmul.f32 %v2389, %v2411
        %v2415 = vperm.slane %v2364, 0
        %v2417 = vmul.f32 %v2412, %v2415
        %v2418 = vmul.f32 %v2413, %v2415
        %v2420 = vperm.slane %v2365, 0
        %v2422 = vadd.f32 %v2417, %v2420
        %v2423 = vadd.f32 %v2418, %v2420
        %v2424 = vpack.c.bf16 %v2423, %v2422
        %v2425 = vld [vmem:[%s692] sm:$0xff]
        %v2426 = vld [vmem:[%s692 + $0x8] sm:$0xff]
        %v2427 = vld [vmem:[%s692 + $0x10] sm:$0xff]
        %v2428 = vld [vmem:[%s692 + $0x18] sm:$0xff]
        %v2429 = vld [vmem:[%s692 + $0x20] sm:$0xff]
        %v2430 = vld [vmem:[%s692 + $0x28] sm:$0xff]
        %v2431 = vld [vmem:[%s692 + $0x30] sm:$0xff]
        %v2432 = vld [vmem:[%s692 + $0x38] sm:$0xff]
        %v2433 = vld [vmem:[%s696] sm:$0x3]
        %v2435 = vperm.slane %v2433, 0
        %v2436 = vperm.slane %v2433, 1
        %v2447 = vunpack.c.l.b16 %v2425
        %v2448 = vunpack.c.h.b16 %v2425
        %v2449 = vunpack.c.l.b16 %v2426
        %v2450 = vunpack.c.h.b16 %v2426
        %v2451 = vunpack.c.l.b16 %v2427
        %v2452 = vunpack.c.h.b16 %v2427
        %v2453 = vunpack.c.l.b16 %v2428
        %v2454 = vunpack.c.h.b16 %v2428
        %v2455 = vunpack.c.l.b16 %v2429
        %v2456 = vunpack.c.h.b16 %v2429
        %v2457 = vunpack.c.l.b16 %v2430
        %v2458 = vunpack.c.h.b16 %v2430
        %v2459 = vunpack.c.l.b16 %v2431
        %v2460 = vunpack.c.h.b16 %v2431
        %v2461 = vunpack.c.l.b16 %v2432
        %v2462 = vunpack.c.h.b16 %v2432
        %v2463 = vpack.c.b16 %v2449, %v2447
        %v2464 = vpack.c.b16 %v2450, %v2448
        %v2465 = vpack.c.b16 %v2453, %v2451
        %v2466 = vpack.c.b16 %v2454, %v2452
        %v2467 = vpack.c.b16 %v2457, %v2455
        %v2468 = vpack.c.b16 %v2458, %v2456
        %v2469 = vpack.c.b16 %v2461, %v2459
        %v2470 = vpack.c.b16 %v2462, %v2460
        %v2480 = vsel %vm721, %v2424, 0
        %2482 = vmatpush.bf16.msra.mxu0 0
        %2483 = vmatpush.bf16.msra.mxu0 0
        %2484 = vmatpush.bf16.msra.mxu0 0
        %2485 = vmatpush.bf16.msra.mxu0 0
        %2486 = vmatpush.bf16.msra.mxu0 %v2469
        %2487 = vmatpush.bf16.msra.mxu0 %v2467
        %2488 = vmatpush.bf16.msra.mxu0 %v2465
        %2489 = vmatpush.bf16.msra.mxu0 %v2463
        %2490 = vmatmul.bf16.gmra.mxu0 %v2480
        %v2491 = vpop.f32.mrf.mxu0
        %v2492 = vadd.f32 %v2435, %v2491
        %v2493 = vpop.f32.mrf.mxu0
        %v2494 = vadd.f32 %v2435, %v2493
        %2495 = vdwg.mxu0
        %2496 = vmatpush.bf16.msra.mxu0 0
        %2497 = vmatpush.bf16.msra.mxu0 0
        %2498 = vmatpush.bf16.msra.mxu0 0
        %2499 = vmatpush.bf16.msra.mxu0 0
        %2500 = vmatpush.bf16.msra.mxu0 %v2470
        %2501 = vmatpush.bf16.msra.mxu0 %v2468
        %2502 = vmatpush.bf16.msra.mxu0 %v2466
        %2503 = vmatpush.bf16.msra.mxu0 %v2464
        %2504 = vmatmul.bf16.gmra.mxu0 %v2480
        %v2505 = vpop.f32.mrf.mxu0
        %v2506 = vadd.f32 %v2436, %v2505
        %v2507 = vpop.f32.mrf.mxu0
        %v2508 = vadd.f32 %v2436, %v2507
        %2509 = vdwg.mxu0
        %v2510 = vpack.c.bf16 %v2506, %v2492
        %v2511 = vpack.c.bf16 %v2508, %v2494
        %v2512 = vunpack.c.l.bf16 %v2510
        %v2513 = vunpack.c.h.bf16 %v2510
        %v2514 = vunpack.c.l.bf16 %v2511
        %v2515 = vunpack.c.h.bf16 %v2511
        %v2516 = vmul.f32 %v2512, 1.703125
        %v2517 = vmul.f32 %v2513, 1.703125
        %v2518 = vmul.f32 %v2514, 1.703125
        %v2519 = vmul.f32 %v2515, 1.703125
        %v2520 = vpack.c.bf16 %v2517, %v2516
        %v2521 = vpack.c.bf16 %v2519, %v2518
        %v2522 = vxor.u32 %v2520, 2147516416
        %v2523 = vxor.u32 %v2521, 2147516416
        %v2524 = vunpack.c.l.bf16 %v2522
        %v2525 = vunpack.c.h.bf16 %v2522
        %v2526 = vunpack.c.l.bf16 %v2523
        %v2527 = vunpack.c.h.bf16 %v2523
        %v2528 = vmul.f32 %v2524, 1.442695
        %v2529 = vpow.pop %v2528
        %v2530 = vmul.f32 %v2525, 1.442695
        %v2531 = vpow.pop %v2530
        %v2532 = vmul.f32 %v2526, 1.442695
        %v2533 = vpow.pop %v2532
        %v2534 = vmul.f32 %v2527, 1.442695
        %v2535 = vpow.pop %v2534
        %v2536 = vpack.c.bf16 %v2531, %v2529
        %v2537 = vpack.c.bf16 %v2535, %v2533
        %v2538 = vunpack.c.l.bf16 %v2536
        %v2539 = vunpack.c.h.bf16 %v2536
        %v2540 = vunpack.c.l.bf16 %v2537
        %v2541 = vunpack.c.h.bf16 %v2537
        %v2542 = vadd.f32 %v2538, 1.0
        %v2543 = vadd.f32 %v2539, 1.0
        %v2544 = vadd.f32 %v2540, 1.0
        %v2545 = vadd.f32 %v2541, 1.0
        %v2546 = vpack.c.bf16 %v2543, %v2542
        %v2547 = vpack.c.bf16 %v2545, %v2544
        %v2548 = vunpack.c.h.bf16 1065369472
        %v2549 = vunpack.c.l.bf16 1065369472
        %v2550 = vunpack.c.h.bf16 %v2546
        %v2551 = vunpack.c.l.bf16 %v2546
        %v2552 = vrcp.pop %v2550
        %v2553 = vmul.f32 %v2548, %v2552
        %v2554 = vrcp.pop %v2551
        %v2555 = vmul.f32 %v2549, %v2554
        %v2556 = vpack.c.bf16 %v2553, %v2555
        %v2557 = vunpack.c.h.bf16 %v2547
        %v2558 = vunpack.c.l.bf16 %v2547
        %v2559 = vrcp.pop %v2557
        %v2560 = vmul.f32 %v2548, %v2559
        %v2561 = vrcp.pop %v2558
        %v2562 = vmul.f32 %v2549, %v2561
        %v2563 = vpack.c.bf16 %v2560, %v2562
        %v2564 = vunpack.c.l.bf16 %v2556
        %v2565 = vunpack.c.h.bf16 %v2556
        %v2566 = vunpack.c.l.bf16 %v2563
        %v2567 = vunpack.c.h.bf16 %v2563
        %v2568 = vmul.f32 %v2512, %v2564
        %v2569 = vmul.f32 %v2513, %v2565
        %v2570 = vmul.f32 %v2514, %v2566
        %v2571 = vmul.f32 %v2515, %v2567
        %v2572 = vpack.c.bf16 %v2570, %v2568
        %v2573 = vpack.c.bf16 %v2571, %v2569
        %v2574 = vld [vmem:[%s701] sm:$0xf]
        %v2575 = vld [vmem:[%s701 + $0x4] sm:$0xf]
        %v2576 = vld [vmem:[%s701 + $0x8] sm:$0xf]
        %v2577 = vld [vmem:[%s701 + $0xc] sm:$0xf]
        %v2578 = vld [vmem:[%s701 + $0x10] sm:$0xf]
        %v2579 = vld [vmem:[%s701 + $0x14] sm:$0xf]
        %v2580 = vld [vmem:[%s701 + $0x18] sm:$0xf]
        %v2581 = vld [vmem:[%s701 + $0x1c] sm:$0xf]
        %v2582 = vld [vmem:[%s701 + $0x20] sm:$0xf]
        %v2583 = vld [vmem:[%s701 + $0x24] sm:$0xf]
        %v2584 = vld [vmem:[%s701 + $0x28] sm:$0xf]
        %v2585 = vld [vmem:[%s701 + $0x2c] sm:$0xf]
        %v2586 = vld [vmem:[%s701 + $0x30] sm:$0xf]
        %v2587 = vld [vmem:[%s701 + $0x34] sm:$0xf]
        %v2588 = vld [vmem:[%s701 + $0x38] sm:$0xf]
        %v2589 = vld [vmem:[%s701 + $0x3c] sm:$0xf]
        %v2590 = vld [vmem:[%s701 + $0x40] sm:$0xf]
        %v2591 = vld [vmem:[%s701 + $0x44] sm:$0xf]
        %v2592 = vld [vmem:[%s701 + $0x48] sm:$0xf]
        %v2593 = vld [vmem:[%s701 + $0x4c] sm:$0xf]
        %v2594 = vld [vmem:[%s701 + $0x50] sm:$0xf]
        %v2595 = vld [vmem:[%s701 + $0x54] sm:$0xf]
        %v2596 = vld [vmem:[%s701 + $0x58] sm:$0xf]
        %v2597 = vld [vmem:[%s701 + $0x5c] sm:$0xf]
        %v2598 = vld [vmem:[%s701 + $0x60] sm:$0xf]
        %v2599 = vld [vmem:[%s701 + $0x64] sm:$0xf]
        %v2600 = vld [vmem:[%s701 + $0x68] sm:$0xf]
        %v2601 = vld [vmem:[%s701 + $0x6c] sm:$0xf]
        %v2602 = vld [vmem:[%s701 + $0x70] sm:$0xf]
        %v2603 = vld [vmem:[%s701 + $0x74] sm:$0xf]
        %v2604 = vld [vmem:[%s701 + $0x78] sm:$0xf]
        %v2605 = vld [vmem:[%s701 + $0x7c] sm:$0xf]
        %v2606 = vld [vmem:[%s704] sm:$0x1]
        %v2608 = vperm.slane %v2606, 0
        %v2642 = vunpack.c.l.b16 %v2574
        %v2643 = vunpack.c.l.b16 %v2575
        %v2644 = vunpack.c.l.b16 %v2576
        %v2645 = vunpack.c.l.b16 %v2577
        %v2646 = vunpack.c.l.b16 %v2578
        %v2647 = vunpack.c.l.b16 %v2579
        %v2648 = vunpack.c.l.b16 %v2580
        %v2649 = vunpack.c.l.b16 %v2581
        %v2650 = vunpack.c.l.b16 %v2582
        %v2651 = vunpack.c.l.b16 %v2583
        %v2652 = vunpack.c.l.b16 %v2584
        %v2653 = vunpack.c.l.b16 %v2585
        %v2654 = vunpack.c.l.b16 %v2586
        %v2655 = vunpack.c.l.b16 %v2587
        %v2656 = vunpack.c.l.b16 %v2588
        %v2657 = vunpack.c.l.b16 %v2589
        %v2658 = vunpack.c.l.b16 %v2590
        %v2659 = vunpack.c.l.b16 %v2591
        %v2660 = vunpack.c.l.b16 %v2592
        %v2661 = vunpack.c.l.b16 %v2593
        %v2662 = vunpack.c.l.b16 %v2594
        %v2663 = vunpack.c.l.b16 %v2595
        %v2664 = vunpack.c.l.b16 %v2596
        %v2665 = vunpack.c.l.b16 %v2597
        %v2666 = vunpack.c.l.b16 %v2598
        %v2667 = vunpack.c.l.b16 %v2599
        %v2668 = vunpack.c.l.b16 %v2600
        %v2669 = vunpack.c.l.b16 %v2601
        %v2670 = vunpack.c.l.b16 %v2602
        %v2671 = vunpack.c.l.b16 %v2603
        %v2672 = vunpack.c.l.b16 %v2604
        %v2673 = vunpack.c.l.b16 %v2605
        %v2674 = vpack.c.b16 %v2643, %v2642
        %v2675 = vpack.c.b16 %v2645, %v2644
        %v2676 = vpack.c.b16 %v2647, %v2646
        %v2677 = vpack.c.b16 %v2649, %v2648
        %v2678 = vpack.c.b16 %v2651, %v2650
        %v2679 = vpack.c.b16 %v2653, %v2652
        %v2680 = vpack.c.b16 %v2655, %v2654
        %v2681 = vpack.c.b16 %v2657, %v2656
        %v2682 = vpack.c.b16 %v2659, %v2658
        %v2683 = vpack.c.b16 %v2661, %v2660
        %v2684 = vpack.c.b16 %v2663, %v2662
        %v2685 = vpack.c.b16 %v2665, %v2664
        %v2686 = vpack.c.b16 %v2667, %v2666
        %v2687 = vpack.c.b16 %v2669, %v2668
        %v2688 = vpack.c.b16 %v2671, %v2670
        %v2689 = vpack.c.b16 %v2673, %v2672
        %2706 = vmatpush.bf16.msra.mxu0 %v2681
        %2707 = vmatpush.bf16.msra.mxu0 %v2680
        %2708 = vmatpush.bf16.msra.mxu0 %v2679
        %2709 = vmatpush.bf16.msra.mxu0 %v2678
        %2710 = vmatpush.bf16.msra.mxu0 %v2677
        %2711 = vmatpush.bf16.msra.mxu0 %v2676
        %2712 = vmatpush.bf16.msra.mxu0 %v2675
        %2713 = vmatpush.bf16.msra.mxu0 %v2674
        %2714 = vmatmul.bf16.gmra.mxu0 %v2572
        %v2715 = vpop.f32.mrf.mxu0
        %v2716 = vadd.f32 %v2608, %v2715
        %v2717 = vpop.f32.mrf.mxu0
        %v2718 = vadd.f32 %v2608, %v2717
        %2719 = vdwg.mxu0
        %2720 = vmatpush.bf16.msra.mxu0 %v2689
        %2721 = vmatpush.bf16.msra.mxu0 %v2688
        %2722 = vmatpush.bf16.msra.mxu0 %v2687
        %2723 = vmatpush.bf16.msra.mxu0 %v2686
        %2724 = vmatpush.bf16.msra.mxu0 %v2685
        %2725 = vmatpush.bf16.msra.mxu0 %v2684
        %2726 = vmatpush.bf16.msra.mxu0 %v2683
        %2727 = vmatpush.bf16.msra.mxu0 %v2682
        %2728 = vmatmul.bf16.gmra.mxu0 %v2573
        %v2729 = vpop.f32.mrf.mxu0
        %v2730 = vadd.f32 %v2716, %v2729
        %v2731 = vpop.f32.mrf.mxu0
        %v2732 = vadd.f32 %v2718, %v2731
        %2733 = vdwg.mxu0
        %v2734 = vadd.f32 %v2362, %v2730
        %v2735 = vadd.f32 %v2363, %v2732
        %p2736 = scmp.lt.s32.totalorder %s34, 1
        // Predicated region
        $region85: #{clip_forward.1} parent=79 // pred_check
          %p2737 = pneg %p2736
        $region86: #{clip_forward.1} parent=79 // pred_check_branch
          %2739 = sbr.rel (%p2737) target = $region88
        $region87: #{clip_forward.1} parent=79 // pred_region
          %2740 = vst.msk [vmem:[%s652] sm:$0xff] %vm721, %v2734
          %2741 = vst.msk [vmem:[%s652 + $0x8] sm:$0xff] %vm721, %v2735
        $region88: #{clip_forward.1} parent=79 // pred_fallthru
          _
        %p2742 = scmp.eq.s32.totalorder %s34, 1
        // Predicated region
        $region89: #{clip_forward.1} parent=79 // pred_check
          %p2743 = pneg %p2742
        $region90: #{clip_forward.1} parent=79 // pred_check_branch
          %2745 = sbr.rel (%p2743) target = $region92
        $region91: #{clip_forward.1} parent=79 // pred_region
          %v2746 = vld [vmem:[%s13] sm:$0x1]
          %v2747 = vld [vmem:[%s14] sm:$0x1]
          %v2748 = vsel %vm721, %v2734, 0.0
          %2749 = vadd.xlane.f32.xlu0 %v2748
          %v2750 = vpop.xlane.xlu0 %2749
          %v2751 = vsel %vm721, %v2735, 0.0
          %2752 = vadd.xlane.f32.xlu0 %v2751
          %v2753 = vpop.xlane.xlu0 %2752
          %v2754 = vmul.f32 %v2750, %v734
          %v2755 = vmul.f32 %v2753, %v734
          %v2756 = vmul.f32 %v2734, %v2734
          %v2757 = vmul.f32 %v2735, %v2735
          %v2758 = vsel %vm721, %v2756, 0.0
          %2759 = vadd.xlane.f32.xlu0 %v2758
          %v2760 = vpop.xlane.xlu0 %2759
          %v2761 = vsel %vm721, %v2757, 0.0
          %2762 = vadd.xlane.f32.xlu0 %v2761
          %v2763 = vpop.xlane.xlu0 %2762
          %v2764 = vmul.f32 %v2760, %v734
          %v2765 = vmul.f32 %v2763, %v734
          %v2766 = vmul.f32 %v2754, %v2754
          %v2767 = vmul.f32 %v2755, %v2755
          %v2768 = vsub.f32 %v2764, %v2766
          %v2769 = vsub.f32 %v2765, %v2767
          %v2770 = vsub.f32 %v2734, %v2754
          %v2771 = vsub.f32 %v2735, %v2755
          %v2772 = vadd.f32 %v2768, 1e-05
          %v2773 = vadd.f32 %v2769, 1e-05
          %v2774 = vrsqrt.pop %v2772
          %v2775 = vmul.f32 %v2774, %v2772
          %v2776 = vmul.f32 %v2775, %v2774
          %v2777 = vmul.f32 0.5, %v2776
          %v2778 = vsub.f32 1.5, %v2777
          %v2779 = vmul.f32 %v2774, %v2778
          %vm2780 = vweird.f32 %v2772
          %vm2781 = vweird.f32 %v2774
          %vm2782 = vmor %vm2780, %vm2781
          %v2783 = vsel %vm2782, %v2774, %v2779
          %v2784 = vrsqrt.pop %v2773
          %v2785 = vmul.f32 %v2784, %v2773
          %v2786 = vmul.f32 %v2785, %v2784
          %v2787 = vmul.f32 0.5, %v2786
          %v2788 = vsub.f32 1.5, %v2787
          %v2789 = vmul.f32 %v2784, %v2788
          %vm2790 = vweird.f32 %v2773
          %vm2791 = vweird.f32 %v2784
          %vm2792 = vmor %vm2790, %vm2791
          %v2793 = vsel %vm2792, %v2784, %v2789
          %v2794 = vmul.f32 %v2770, %v2783
          %v2795 = vmul.f32 %v2771, %v2793
          %v2797 = vperm.slane %v2746, 0
          %v2799 = vmul.f32 %v2794, %v2797
          %v2800 = vmul.f32 %v2795, %v2797
          %v2802 = vperm.slane %v2747, 0
          %v2804 = vadd.f32 %v2799, %v2802
          %v2805 = vadd.f32 %v2800, %v2802
          %2806 = vst.msk [vmem:[%s652] sm:$0xff] %vm721, %v2804
          %2807 = vst.msk [vmem:[%s652 + $0x8] sm:$0xff] %vm721, %v2805
        $region92: #{clip_forward.1} parent=79 // pred_fallthru
          _
        %s2808 = sand.u32 %s429, 1
        %s2809 = scalar_lea.sflag [#allocation3], %s2808
        %s2810 = sand.u32 %s429, 1
        %s2811 = smul.addr %s2810, 16
        %s2812 = scalar_lea.vmem [#allocation2], %s2811
        // Predicated region
        $region93: #{clip_forward.1} parent=79 // pred_check
          %p2813 = pneg %p439
        $region94: #{clip_forward.1} parent=79 // pred_check_branch
          %2815 = sbr.rel (%p2813) target = $region96
        $region95: #{clip_forward.1} parent=79 // pred_region
          %s2816 = smul.u32 2, %s33
          %2818 = vsyncadd %s2809, 0
          %s2819 = smul.addr %s2816, 8
          %s2820 = scalar_lea.hbm %s15, %s2819
          %s2821 = sshll.u32 %s2812, 4
          %s2822 = int_to_ptr.vmem [resolvable:$true] %s2821
          %s2823 = sshll.u32 %s2820, 4
          %s2824 = int_to_ptr.hbm [resolvable:$true] %s2823
          %2829 = dma.vmem_to_hbm [thread:$0]  %s2822, 256, %s2824, %s2809, 128, 128, 8
        $region96: #{clip_forward.1} parent=79 // pred_fallthru
          _
      $region80: #{clip_forward.1} parent=5 // pred_fallthru
        _
      %p2830 = scmp.le.s32.totalorder 2, %s24
      // Predicated region
      $region97: #{clip_forward.1} parent=5 // pred_check
        %p2831 = pneg %p2830
      $region98: #{clip_forward.1} parent=5 // pred_check_branch
        %2833 = sbr.rel (%p2831) target = $region100
      $region99: #{clip_forward.1} parent=5 // pred_region
        %s2834 = ssub.s32 %s24, 2
        // Predicated region
        $region101: #{clip_forward.1} parent=99 // pred_check
          %p2835 = pneg %p445
        $region102: #{clip_forward.1} parent=99 // pred_check_branch
          %2837 = sbr.rel (%p2835) target = $region104
        $region103: #{clip_forward.1} parent=99 // pred_region
          %s2838 = sand.u32 %s430, 1
          %s2839 = scalar_lea.sflag [#allocation3], %s2838
          %s2840 = sand.u32 %s430, 1
          %s2841 = smul.addr %s2840, 16
          %s2842 = scalar_lea.vmem [#allocation2], %s2841
          %2844 = dma.done %s2839, 256
        $region104: #{clip_forward.1} parent=99 // pred_fallthru
          _
      $region100: #{clip_forward.1} parent=5 // pred_fallthru
        _
    $region6: #{clip_forward.1} parent=1 // loop_footer
      %s28 = sadd.s32 1, %s24
    $region7: #{clip_forward.1} parent=1 // loop_footer_branch
      %23 = sbr.rel target = $region3
    $region8: #{clip_forward.1} parent=1 // loop_exit
      _
    %2845 = vsyncpa [#allocation3], 1
    %s2846 = scalar_lea.sflag [#allocation3], 1
    %2847 = vsyncpa %s2846, 1

</llo_original>
